<compile_context>
chip_gen: v6e
topology: v6e:2x2x1
jax: 0.10.0
libtpu: 0.0.40
codegen_flags: <defaults>
</compile_context>

<pallas_src>
import functools

import jax
import jax.numpy as jnp
from jax.experimental import pallas as pl
from jax.experimental.pallas import tpu as pltpu

NEG_SLOPE = 0.01  # nn.LeakyReLU default


def _leaky_relu(x):
    return jnp.where(x >= 0, x, NEG_SLOPE * x)


def _round_up(x, m):
    return (x + m - 1) // m * m


def _pick_tile(requested, n_pad, prefer_split=False):
    """Largest multiple of 128 that is <= requested, divides n_pad, and (if
    prefer_split) leaves at least 2 tiles for megacore sharding."""
    cap = min(requested, n_pad)
    if prefer_split and n_pad >= 256:
        cap = min(cap, n_pad // 2)
    cap = max(128, cap - cap % 128)
    t = cap
    while n_pad % t:
        t -= 128
    return t


def kgat_bi_kernel(nnz_ref, fk_ref, norm_ref, ego_ref, w1_ref, b1_ref,
                   w2_ref, b2_ref, out_ref, side_acc, *, tm, tk):
    """One (row-tile i, reduction-tile k) grid step.

    Accumulates side = norm @ ego over k (skipping all-zero norm blocks); on
    the last k step it fuses the two Linear layers + LeakyReLU + sum.
    """
    i = pl.program_id(0)
    k = pl.program_id(1)

    @pl.when(k == 0)
    def _():
        side_acc[...] = jnp.zeros_like(side_acc)

    # Skip both the MXU work (here) and the DMA (via index_map returning the
    # previously-fetched block index) for all-zero norm blocks.
    @pl.when(nnz_ref[i, k] > 0)
    def _():
        ego_k = ego_ref[pl.ds(pl.multiple_of(k * tk, tk), tk), :]
        side_acc[...] += jnp.dot(norm_ref[...], ego_k,
                                 preferred_element_type=jnp.float32)

    @pl.when(k == pl.num_programs(1) - 1)
    def _():
        ego_i = ego_ref[pl.ds(pl.multiple_of(i * tm, tm), tm), :].astype(jnp.float32)
        side = side_acc[...]
        add_emb = (ego_i + side).astype(jnp.bfloat16)
        bi_emb = (ego_i * side).astype(jnp.bfloat16)
        sum_out = jnp.dot(add_emb, w1_ref[...],
                          preferred_element_type=jnp.float32) + b1_ref[...]
        bi_out = jnp.dot(bi_emb, w2_ref[...],
                         preferred_element_type=jnp.float32) + b2_ref[...]
        # TODO(synk): message_dropout omitted (identity in eval mode).
        out_ref[...] = (_leaky_relu(bi_out) + _leaky_relu(sum_out)).astype(out_ref.dtype)


@functools.partial(jax.jit, static_argnames=("tm", "tk"))
def kgat_bi_aggregator(norm_matrix, ego, w1_t, b1, w2_t, b2, *, tm=256, tk=512):
    N, D = ego.shape
    Dout = w1_t.shape[1]

    # Pad everything to lane-dense / MXU-friendly sizes.
    N_pad = _round_up(N, 128)
    D_pad = _round_up(D, 128)
    Dout_pad = _round_up(Dout, 128)

    tm = _pick_tile(tm, N_pad, prefer_split=True)   # >= 2 row tiles for megacore
    tk = _pick_tile(tk, N_pad)
    ni, nk = N_pad // tm, N_pad // tk

    # bf16 inputs (f32 accumulation inside the kernel), zero-padded.
    norm_b = jnp.pad(norm_matrix, ((0, N_pad - N), (0, N_pad - N))).astype(jnp.bfloat16)
    ego_p = jnp.pad(ego, ((0, N_pad - N), (0, D_pad - D))).astype(jnp.bfloat16)
    w1_p = jnp.pad(w1_t, ((0, D_pad - D), (0, Dout_pad - Dout))).astype(jnp.bfloat16)
    w2_p = jnp.pad(w2_t, ((0, D_pad - D), (0, Dout_pad - Dout))).astype(jnp.bfloat16)
    b1_p = jnp.pad(b1, ((0, 0), (0, Dout_pad - Dout))).astype(jnp.float32)
    b2_p = jnp.pad(b2, ((0, 0), (0, Dout_pad - Dout))).astype(jnp.float32)

    # Block-level sparsity map of norm_matrix (scalar-prefetched into SMEM).
    blocks = norm_b.astype(jnp.float32).reshape(ni, tm, nk, tk)
    block_nnz = (jnp.max(jnp.abs(blocks), axis=(1, 3)) > 0).astype(jnp.int32)
    col_idx = jax.lax.broadcasted_iota(jnp.int32, (ni, nk), 1)
    # For zero blocks, re-return the last nonzero block index of this row so
    # the auto-pipeliner can skip the DMA; compute is pl.when-gated anyway.
    fetch_k = jax.lax.cummax(jnp.where(block_nnz > 0, col_idx, -1), axis=1)
    fetch_k = jnp.maximum(fetch_k, 0).astype(jnp.int32)

    # VMEM budget (norm + resident ego + out double-buffered, weights, scratch).
    vmem_bytes = (
        2 * tm * tk * 2                  # norm tiles (bf16, double-buffered)
        + 2 * N_pad * D_pad * 2          # resident ego (bf16)
        + 2 * tm * Dout_pad * 4          # output tiles (f32)
        + 2 * 2 * D_pad * Dout_pad * 2   # W1, W2 (bf16)
        + 2 * 2 * Dout_pad * 4           # biases (f32)
        + tm * D_pad * 4                 # side accumulator scratch (f32)
    )
    vmem_limit = int(min(max(2 * vmem_bytes, 16 * 2**20), 48 * 2**20))
    # TODO(synk): for very large graphs (N_pad*D_pad beyond ~8-16 MB) fall back
    # to streaming ego tiles (two BlockSpecs) instead of VMEM residency.

    out = pl.pallas_call(
        functools.partial(kgat_bi_kernel, tm=tm, tk=tk),
        out_shape=jax.ShapeDtypeStruct((N_pad, Dout_pad), ego.dtype),
        grid_spec=pltpu.PrefetchScalarGridSpec(
            num_scalar_prefetch=2,
            grid=(ni, nk),
            in_specs=[
                pl.BlockSpec((tm, tk), lambda i, k, nnz, fk: (i, fk[i, k])),    # norm
                pl.BlockSpec((N_pad, D_pad), lambda i, k, nnz, fk: (0, 0)),     # ego (resident)
                pl.BlockSpec((D_pad, Dout_pad), lambda i, k, nnz, fk: (0, 0)),  # W1^T
                pl.BlockSpec((1, Dout_pad), lambda i, k, nnz, fk: (0, 0)),      # b1
                pl.BlockSpec((D_pad, Dout_pad), lambda i, k, nnz, fk: (0, 0)),  # W2^T
                pl.BlockSpec((1, Dout_pad), lambda i, k, nnz, fk: (0, 0)),      # b2
            ],
            out_specs=pl.BlockSpec((tm, Dout_pad), lambda i, k, nnz, fk: (i, 0)),
            scratch_shapes=[pltpu.VMEM((tm, D_pad), jnp.float32)],
        ),
        compiler_params=pltpu.CompilerParams(
            dimension_semantics=("parallel", "arbitrary"),
            vmem_limit_bytes=vmem_limit),
    )(block_nnz, fetch_k, norm_b, ego_p, w1_p, b1_p, w2_p, b2_p)

    return out[:N, :Dout]


def reference_f32(norm_matrix, ego, w1_t, b1, w2_t, b2):
    side = norm_matrix @ ego
    sum_out = _leaky_relu((ego + side) @ w1_t + b1)
    bi_out = _leaky_relu((ego * side) @ w2_t + b2)
    return bi_out + sum_out


def reference_bf16(norm_matrix, ego, w1_t, b1, w2_t, b2):
    # Mirrors the kernel's bf16 casts (f32 accumulation) for a tight check.
    nb = norm_matrix.astype(jnp.bfloat16).astype(jnp.float32)
    eb = ego.astype(jnp.bfloat16).astype(jnp.float32)
    w1b = w1_t.astype(jnp.bfloat16).astype(jnp.float32)
    w2b = w2_t.astype(jnp.bfloat16).astype(jnp.float32)
    side = nb @ eb
    add = (eb + side).astype(jnp.bfloat16).astype(jnp.float32)
    mul = (eb * side).astype(jnp.bfloat16).astype(jnp.float32)
    sum_out = _leaky_relu(add @ w1b + b1)
    bi_out = _leaky_relu(mul @ w2b + b2)
    return bi_out + sum_out


def _linear_params(key, in_dim, out_dim):
    # Deterministic init mimicking nn.Linear (uniform +/- 1/sqrt(in_dim)).
    kw, kb = jax.random.split(key)
    bound = 1.0 / (in_dim ** 0.5)
    w = jax.random.uniform(kw, (out_dim, in_dim), jnp.float32, -bound, bound)
    b = jax.random.uniform(kb, (1, out_dim), jnp.float32, -bound, bound)
    return w, b


def _make_graph(key, n, d):
    k_norm, k_ego = jax.random.split(key)
    # Sparse-ish normalized adjacency, densified for the kernel.
    norm = jax.random.uniform(k_norm, (n, n), jnp.float32)
    norm = jnp.where(norm > 0.9, norm, 0.0)
    if n >= 256:
        # Force one all-zero 128x128+ block so the block-skip path is exercised.
        norm = norm.at[:128, 128:256].set(0.0)
    norm = norm / (jnp.sum(norm, axis=1, keepdims=True) + 1e-8)
    ego = jax.random.normal(k_ego, (n, d), jnp.float32)
    return norm, ego


if __name__ == "__main__":
    D, Dout = 64, 64
    key = jax.random.PRNGKey(0)
    k_graph, k_w1, k_w2, k_graph2 = jax.random.split(key, 4)

    w1, b1 = _linear_params(k_w1, D, Dout)
    w2, b2 = _linear_params(k_w2, D, Dout)
    w1_t, w2_t = w1.T, w2.T     # pass as [D, Dout] so kernel does x @ W^T

    # --- Test 1: N multiple of 128, small tiles (multi-block grid,
    #             k-accumulation, block skipping). ---
    N = 256
    norm_matrix, ego = _make_graph(k_graph, N, D)
    ref_b = reference_bf16(norm_matrix, ego, w1_t, b1, w2_t, b2)
    ref_f = reference_f32(norm_matrix, ego, w1_t, b1, w2_t, b2)

    out1 = kgat_bi_aggregator(norm_matrix, ego, w1_t, b1, w2_t, b2, tm=128, tk=128)
    out1 = jax.block_until_ready(out1)
    assert out1.shape == (N, Dout)
    assert jnp.allclose(out1, ref_b, atol=5e-3, rtol=5e-3), (
        float(jnp.max(jnp.abs(out1 - ref_b))))
    assert jnp.allclose(out1, ref_f, atol=5e-2, rtol=5e-2), (
        float(jnp.max(jnp.abs(out1 - ref_f))))

    # Default (large) tiles on the same graph.
    out2 = kgat_bi_aggregator(norm_matrix, ego, w1_t, b1, w2_t, b2)
    out2 = jax.block_until_ready(out2)
    assert jnp.allclose(out2, ref_b, atol=5e-3, rtol=5e-3), (
        float(jnp.max(jnp.abs(out2 - ref_b))))

    # --- Test 2: ragged N (exercises the padding path). ---
    N2 = 200
    norm2, ego2 = _make_graph(k_graph2, N2, D)
    ref2 = reference_bf16(norm2, ego2, w1_t, b1, w2_t, b2)
    out3 = kgat_bi_aggregator(norm2, ego2, w1_t, b1, w2_t, b2)
    out3 = jax.block_until_ready(out3)
    assert out3.shape == (N2, Dout)
    assert jnp.allclose(out3, ref2, atol=5e-3, rtol=5e-3), (
        float(jnp.max(jnp.abs(out3 - ref2))))

    print("KERNEL_OK")
</pallas_src>

<mosaic_0001>
module attributes {stable_mosaic.version = 11 : i64} {
  func.func @kgat_bi_kernel(%arg0: i32, %arg1: i32, %arg2: memref<2x2xi32, #tpu.memory_space<smem>>, %arg3: memref<2x2xi32, #tpu.memory_space<smem>>, %arg4: memref<128x128xbf16, #tpu.memory_space<vmem>>, %arg5: memref<256x128xbf16, #tpu.memory_space<vmem>>, %arg6: memref<128x128xbf16, #tpu.memory_space<vmem>>, %arg7: memref<1x128xf32, #tpu.memory_space<vmem>>, %arg8: memref<128x128xbf16, #tpu.memory_space<vmem>>, %arg9: memref<1x128xf32, #tpu.memory_space<vmem>>, %arg10: memref<128x128xf32, #tpu.memory_space<vmem>>, %arg11: memref<128x128xf32, #tpu.memory_space<vmem>>) attributes {dimension_semantics = [#tpu.dimension_semantics<parallel>, #tpu.dimension_semantics<arbitrary>], iteration_bounds = array<i64: 2, 2>, scalar_prefetch = 2 : i64, scratch_operands = 1 : i64, tpu.core_type = #tpu.core_type<tc>, window_params = [{transform_indices = @transform_0, window_bounds = array<i64: 128, 128>}, {pipeline_mode = #tpu.pipeline_mode<synchronous>, transform_indices = @transform_1, window_bounds = array<i64: 256, 128>}, {pipeline_mode = #tpu.pipeline_mode<synchronous>, transform_indices = @transform_2, window_bounds = array<i64: 128, 128>}, {pipeline_mode = #tpu.pipeline_mode<synchronous>, transform_indices = @transform_3, window_bounds = array<i64: 1, 128>}, {pipeline_mode = #tpu.pipeline_mode<synchronous>, transform_indices = @transform_4, window_bounds = array<i64: 128, 128>}, {pipeline_mode = #tpu.pipeline_mode<synchronous>, transform_indices = @transform_5, window_bounds = array<i64: 1, 128>}, {transform_indices = @transform_6, window_bounds = array<i64: 128, 128>}]} {
    %c0_i32 = arith.constant 0 : i32
    %0 = arith.cmpi eq, %arg1, %c0_i32 : i32
    %1 = arith.extui %0 : i1 to i32
    %c0_i32_0 = arith.constant 0 : i32
    %2 = arith.cmpi ne, %1, %c0_i32_0 : i32
    scf.if %2 {
      %cst = arith.constant 0.000000e+00 : f32
      %12 = vector.broadcast %cst : f32 to vector<128x128xf32>
      %c0 = arith.constant 0 : index
      %c0_4 = arith.constant 0 : index
      %13 = vector.load %arg11[%c0, %c0_4] : memref<128x128xf32, #tpu.memory_space<vmem>>, vector<128x128xf32>
      tpu.vector_store %arg11[%c0, %c0_4], %12 {strides = array<i32>} : memref<128x128xf32, #tpu.memory_space<vmem>>, vector<128x128xf32>,
    } else {
    }
    %3 = arith.index_cast %arg0 : i32 to index
    %4 = arith.index_cast %arg1 : i32 to index
    %5 = memref.load %arg2[%3, %4] : memref<2x2xi32, #tpu.memory_space<smem>>
    %c0_i32_1 = arith.constant 0 : i32
    %6 = arith.cmpi sgt, %5, %c0_i32_1 : i32
    %7 = arith.extui %6 : i1 to i32
    %c0_i32_2 = arith.constant 0 : i32
    %8 = arith.cmpi ne, %7, %c0_i32_2 : i32
    scf.if %8 {
      %c128_i32 = arith.constant 128 : i32
      %12 = arith.muli %arg1, %c128_i32 : i32
      %13 = tpu.assume_multiple %12, 128 : i32
      %14 = arith.index_cast %13 : i32 to index
      %c0 = arith.constant 0 : index
      %15 = vector.load %arg5[%14, %c0] : memref<256x128xbf16, #tpu.memory_space<vmem>>, vector<128x128xbf16>
      %c0_4 = arith.constant 0 : index
      %c0_5 = arith.constant 0 : index
      %16 = vector.load %arg11[%c0_4, %c0_5] : memref<128x128xf32, #tpu.memory_space<vmem>>, vector<128x128xf32>
      %c0_6 = arith.constant 0 : index
      %c0_7 = arith.constant 0 : index
      %17 = vector.load %arg4[%c0_6, %c0_7] : memref<128x128xbf16, #tpu.memory_space<vmem>>, vector<128x128xbf16>
      %cst = arith.constant dense<0.000000e+00> : vector<128x128xf32>
      %18 = tpu.matmul %17, %15, %cst {dimension_numbers = #tpu.dot_dimension_numbers<[1], [0], [0], [1], [0, 0, 1, 1], [], []>} : vector<128x128xbf16>, vector<128x128xbf16>, vector<128x128xf32> -> vector<128x128xf32>
      %19 = arith.addf %16, %18 : vector<128x128xf32>
      %c0_8 = arith.constant 0 : index
      %c0_9 = arith.constant 0 : index
      %20 = vector.load %arg11[%c0_8, %c0_9] : memref<128x128xf32, #tpu.memory_space<vmem>>, vector<128x128xf32>
      tpu.vector_store %arg11[%c0_8, %c0_9], %19 {strides = array<i32>} : memref<128x128xf32, #tpu.memory_space<vmem>>, vector<128x128xf32>,
    } else {
    }
    %c1_i32 = arith.constant 1 : i32
    %9 = arith.cmpi eq, %arg1, %c1_i32 : i32
    %10 = arith.extui %9 : i1 to i32
    %c0_i32_3 = arith.constant 0 : i32
    %11 = arith.cmpi ne, %10, %c0_i32_3 : i32
    scf.if %11 {
      %c128_i32 = arith.constant 128 : i32
      %12 = arith.muli %arg0, %c128_i32 : i32
      %13 = tpu.assume_multiple %12, 128 : i32
      %14 = arith.index_cast %13 : i32 to index
      %c0 = arith.constant 0 : index
      %15 = vector.load %arg5[%14, %c0] : memref<256x128xbf16, #tpu.memory_space<vmem>>, vector<128x128xbf16>
      %16 = arith.extf %15 : vector<128x128xbf16> to vector<128x128xf32>
      %c0_4 = arith.constant 0 : index
      %c0_5 = arith.constant 0 : index
      %17 = vector.load %arg11[%c0_4, %c0_5] : memref<128x128xf32, #tpu.memory_space<vmem>>, vector<128x128xf32>
      %18 = arith.addf %16, %17 : vector<128x128xf32>
      %19 = arith.truncf %18 : vector<128x128xf32> to vector<128x128xbf16>
      %20 = arith.mulf %16, %17 : vector<128x128xf32>
      %21 = arith.truncf %20 : vector<128x128xf32> to vector<128x128xbf16>
      %c0_6 = arith.constant 0 : index
      %c0_7 = arith.constant 0 : index
      %22 = vector.load %arg6[%c0_6, %c0_7] : memref<128x128xbf16, #tpu.memory_space<vmem>>, vector<128x128xbf16>
      %cst = arith.constant dense<0.000000e+00> : vector<128x128xf32>
      %23 = tpu.matmul %19, %22, %cst {dimension_numbers = #tpu.dot_dimension_numbers<[1], [0], [0], [1], [0, 0, 1, 1], [], []>} : vector<128x128xbf16>, vector<128x128xbf16>, vector<128x128xf32> -> vector<128x128xf32>
      %c0_8 = arith.constant 0 : index
      %c0_9 = arith.constant 0 : index
      %24 = vector.load %arg7[%c0_8, %c0_9] : memref<1x128xf32, #tpu.memory_space<vmem>>, vector<1x128xf32>
      %25 = vector.broadcast %24 : vector<1x128xf32> to vector<128x128xf32>
      %26 = arith.addf %23, %25 : vector<128x128xf32>
      %c0_10 = arith.constant 0 : index
      %c0_11 = arith.constant 0 : index
      %27 = vector.load %arg8[%c0_10, %c0_11] : memref<128x128xbf16, #tpu.memory_space<vmem>>, vector<128x128xbf16>
      %cst_12 = arith.constant dense<0.000000e+00> : vector<128x128xf32>
      %28 = tpu.matmul %21, %27, %cst_12 {dimension_numbers = #tpu.dot_dimension_numbers<[1], [0], [0], [1], [0, 0, 1, 1], [], []>} : vector<128x128xbf16>, vector<128x128xbf16>, vector<128x128xf32> -> vector<128x128xf32>
      %c0_13 = arith.constant 0 : index
      %c0_14 = arith.constant 0 : index
      %29 = vector.load %arg9[%c0_13, %c0_14] : memref<1x128xf32, #tpu.memory_space<vmem>>, vector<1x128xf32>
      %30 = vector.broadcast %29 : vector<1x128xf32> to vector<128x128xf32>
      %31 = arith.addf %28, %30 : vector<128x128xf32>
      %cst_15 = arith.constant 0.000000e+00 : f32
      %32 = vector.broadcast %cst_15 : f32 to vector<128x128xf32>
      %33 = arith.cmpf oge, %31, %32 : vector<128x128xf32>
      %cst_16 = arith.constant 0.00999999977 : f32
      %34 = vector.broadcast %cst_16 : f32 to vector<128x128xf32>
      %35 = arith.mulf %34, %31 : vector<128x128xf32>
      %36 = arith.select %33, %31, %35 : vector<128x128xi1>, vector<128x128xf32>
      %cst_17 = arith.constant 0.000000e+00 : f32
      %37 = vector.broadcast %cst_17 : f32 to vector<128x128xf32>
      %38 = arith.cmpf oge, %26, %37 : vector<128x128xf32>
      %cst_18 = arith.constant 0.00999999977 : f32
      %39 = vector.broadcast %cst_18 : f32 to vector<128x128xf32>
      %40 = arith.mulf %39, %26 : vector<128x128xf32>
      %41 = arith.select %38, %26, %40 : vector<128x128xi1>, vector<128x128xf32>
      %42 = arith.addf %36, %41 : vector<128x128xf32>
      %c0_19 = arith.constant 0 : index
      %c0_20 = arith.constant 0 : index
      %43 = vector.load %arg10[%c0_19, %c0_20] : memref<128x128xf32, #tpu.memory_space<vmem>>, vector<128x128xf32>
      tpu.vector_store %arg10[%c0_19, %c0_20], %42 {strides = array<i32>} : memref<128x128xf32, #tpu.memory_space<vmem>>, vector<128x128xf32>,
    } else {
    }
    return
  }
  func.func @transform_0(%arg0: i32, %arg1: i32, %arg2: memref<2x2xi32, #tpu.memory_space<smem>>, %arg3: memref<2x2xi32, #tpu.memory_space<smem>>) -> (i32, i32) {
    %0 = arith.index_cast %arg0 : i32 to index
    %1 = arith.index_cast %arg1 : i32 to index
    %2 = memref.load %arg3[%0, %1] : memref<2x2xi32, #tpu.memory_space<smem>>
    %c0_i32 = arith.constant 0 : i32
    return %arg0, %2 : i32, i32
  }
  func.func @transform_1(%arg0: i32, %arg1: i32, %arg2: memref<2x2xi32, #tpu.memory_space<smem>>, %arg3: memref<2x2xi32, #tpu.memory_space<smem>>) -> (i32, i32) {
    %c0_i32 = arith.constant 0 : i32
    %c0_i32_0 = arith.constant 0 : i32
    %c0_i32_1 = arith.constant 0 : i32
    return %c0_i32, %c0_i32_0 : i32, i32
  }
  func.func @transform_2(%arg0: i32, %arg1: i32, %arg2: memref<2x2xi32, #tpu.memory_space<smem>>, %arg3: memref<2x2xi32, #tpu.memory_space<smem>>) -> (i32, i32) {
    %c0_i32 = arith.constant 0 : i32
    %c0_i32_0 = arith.constant 0 : i32
    %c0_i32_1 = arith.constant 0 : i32
    return %c0_i32, %c0_i32_0 : i32, i32
  }
  func.func @transform_3(%arg0: i32, %arg1: i32, %arg2: memref<2x2xi32, #tpu.memory_space<smem>>, %arg3: memref<2x2xi32, #tpu.memory_space<smem>>) -> (i32, i32) {
    %c0_i32 = arith.constant 0 : i32
    %c0_i32_0 = arith.constant 0 : i32
    %c0_i32_1 = arith.constant 0 : i32
    return %c0_i32, %c0_i32_0 : i32, i32
  }
  func.func @transform_4(%arg0: i32, %arg1: i32, %arg2: memref<2x2xi32, #tpu.memory_space<smem>>, %arg3: memref<2x2xi32, #tpu.memory_space<smem>>) -> (i32, i32) {
    %c0_i32 = arith.constant 0 : i32
    %c0_i32_0 = arith.constant 0 : i32
    %c0_i32_1 = arith.constant 0 : i32
    return %c0_i32, %c0_i32_0 : i32, i32
  }
  func.func @transform_5(%arg0: i32, %arg1: i32, %arg2: memref<2x2xi32, #tpu.memory_space<smem>>, %arg3: memref<2x2xi32, #tpu.memory_space<smem>>) -> (i32, i32) {
    %c0_i32 = arith.constant 0 : i32
    %c0_i32_0 = arith.constant 0 : i32
    %c0_i32_1 = arith.constant 0 : i32
    return %c0_i32, %c0_i32_0 : i32, i32
  }
  func.func @transform_6(%arg0: i32, %arg1: i32, %arg2: memref<2x2xi32, #tpu.memory_space<smem>>, %arg3: memref<2x2xi32, #tpu.memory_space<smem>>) -> (i32, i32) {
    %c0_i32 = arith.constant 0 : i32
    %c0_i32_0 = arith.constant 0 : i32
    return %arg0, %c0_i32 : i32, i32
  }
}

</mosaic_0001>

<llo_original>
// kernel: kgat_bi_aggregator.1
$region0: #{kgat_bi_aggregator.1}
  #allocation0 [shape = 'u32[]', space=smem, size = 0x4, offset = 0x4, fixed_abs, tag = 'smem constant byte address 0x4 - core index']
  #allocation1 [shape = 'u32[144,128]{1,0:T(1,128)}', space=vmem, size = 0x12000, scoped, tag = 'internal scratch']
  #allocation2 [shape = 'f32[128,128]{1,0:T(8,128)}', space=vmem, size = 0x10000, scoped, tag = 'scratch operand']
  #allocation3 [shape = 's32[1]{0}', space=sflag, size = 0x4, scoped, tag = 'scoped memory for kgat_bi_aggregator.1']
  #allocation4 [shape = 'u8[1024]{0}', space=smem, size = 0x400, scoped, tag = 'prefetched SMEM operand 0']
  #allocation5 [shape = 'u8[1024]{0}', space=smem, size = 0x400, scoped, tag = 'prefetched SMEM operand 1']
  %s0 = inlined_call_operand.vmem [shape: s32[2,2], index: 0, kind: input, shape index: {}]
  %s1 = inlined_call_operand.vmem [shape: s32[2,2], index: 1, kind: input, shape index: {}]
  %s2 = inlined_call_operand.vmem [shape: bf16[256,256], index: 2, kind: input, shape index: {}]
  %s3 = inlined_call_operand.vmem [shape: bf16[256,128], index: 3, kind: input, shape index: {}]
  %s4 = inlined_call_operand.vmem [shape: bf16[128,128], index: 4, kind: input, shape index: {}]
  %s5 = inlined_call_operand.vmem [shape: f32[1,128], index: 5, kind: input, shape index: {}]
  %s6 = inlined_call_operand.vmem [shape: bf16[128,128], index: 6, kind: input, shape index: {}]
  %s7 = inlined_call_operand.vmem [shape: f32[1,128], index: 7, kind: input, shape index: {}]
  %s8 = inlined_call_operand.vmem [shape: f32[256,128], index: 8, kind: output, shape index: {}]
  %s9 = sld [smem:[#allocation0]]
  $region110: #{kgat_bi_aggregator.1} parent=0
    _
  %s11 = ssub.s32 1, %s9
  %s12 = scalar_select 0, %s11, %s9
  %s13 = sshll.u32 %s0, 4
  %s14 = int_to_ptr.vmem [resolvable:$true] %s13
  %16 = dma.vmem_to_smem %s14, 32, [#allocation4], [#allocation3]
  %s17 = sshll.u32 %s1, 4
  %s18 = int_to_ptr.vmem [resolvable:$true] %s17
  %20 = dma.vmem_to_smem %s18, 32, [#allocation5], [#allocation3]
  %21 = dma.done [#allocation3], 64
  %22 = sfence
  $region1: #{kgat_bi_aggregator.1} parent=0
    #allocation6 [shape = 'u8[65536]{0}', space=vmem, size = 0x10000, scoped, tag = 'input window, operand 2']
    loop: start=0, step=1, limit=6
    $region2: #{kgat_bi_aggregator.1} parent=1 // loop_pre_header
      _
    $region3: #{kgat_bi_aggregator.1} parent=1 // loop_header
      %s24 = sphi 0, %s28
      %p25 = scmp.ge.s32.totalorder %s24, 6
      %s31 = sphi 0, %s43
      %s32 = sphi 0, %s39
      %s33 = sphi 0, %s31
      %s34 = sphi 0, %s32
      %s35 = sphi 0, %s33
      %s36 = sphi 0, %s34
      %s64 = sphi 0, %s66
      %s67 = sphi 0, %s64
      %s68 = sphi 0, %s67
      %s84 = sphi 0, %s68
      %s88 = sphi 0, %s88
      %s90 = sphi 0, %s88
      %s91 = sphi 0, %s90
      %s105 = sphi 0, %s91
      %s109 = sphi 0, %s109
      %s111 = sphi 0, %s109
      %s112 = sphi 0, %s111
      %s126 = sphi 0, %s112
      %s130 = sphi 0, %s130
      %s132 = sphi 0, %s130
      %s133 = sphi 0, %s132
      %s147 = sphi 0, %s133
      %s151 = sphi 0, %s151
      %s153 = sphi 0, %s151
      %s154 = sphi 0, %s153
      %s168 = sphi 0, %s154
      %s172 = sphi 0, %s172
      %s174 = sphi 0, %s172
      %s175 = sphi 0, %s174
      %s189 = sphi 0, %s175
      %s195 = sphi 0, %s197
      %s198 = sphi 0, %s195
      %s199 = sphi 0, %s198
      %s215 = sphi 0, %s199
    $region4: #{kgat_bi_aggregator.1} parent=1 // loop_header_branch
      %27 = sbr.rel (%p25) target = $region8
    $region5: #{kgat_bi_aggregator.1} parent=1 // loop_body
      %s29 = ssub.s32 %s24, 1
      %s30 = ssub.s32 %s24, 2
      %s37 = sadd.s32 1, %s32
      %p38 = scmp.ge.s32.totalorder %s37, 2
      %s39 = scalar_select %p38, 0, %s37
      %s40 = sadd.s32 1, %s31
      %s41 = scalar_select %p38, %s40, %s31
      %p42 = scmp.ge.s32.totalorder %s41, 2
      %s43 = scalar_select %p42, 0, %s41
      %s44 = sshra.s32 %s32, 7
      %s45 = sand.u32 %s32, 127
      %s46 = sadd.s32 %s44, %s31
      %s47 = smul.u32 %s46, 128
      %s48 = sshra.s32 %s32, 7
      %s49 = sand.u32 %s32, 127
      %s50 = sadd.s32 %s47, %s49
      %s51 = sld [smem:[#allocation5 + %s50]]
      %s52 = sshra.s32 %s39, 7
      %s53 = sand.u32 %s39, 127
      %s54 = sadd.s32 %s52, %s43
      %s55 = smul.u32 %s54, 128
      %s56 = sshra.s32 %s39, 7
      %s57 = sand.u32 %s39, 127
      %s58 = sadd.s32 %s55, %s57
      %s59 = sld [smem:[#allocation5 + %s58]]
      %s60 = ssub.s32 %s31, %s43
      %s61 = ssub.s32 %s51, %s59
      %s62 = sor.u32 %s60, %s61
      %p63 = scmp.eq.s32.totalorder %s62, 0
      %s65 = sadd.s32 %s64, 1
      %s66 = scalar_select %p63, %s64, %s65
      %p69 = pneg %p63
      %p70 = scmp.eq.s32.totalorder %s24, 3
      %p71 = por %p69, %p70
      %p72 = scmp.ne.s32.totalorder %s64, %s67
      %p73 = scmp.eq.s32.totalorder %s24, 0
      %p74 = por %p72, %p73
      %p75 = scmp.ne.s32.totalorder %s64, %s67
      %p76 = scmp.eq.s32.totalorder %s29, 3
      %p77 = por %p75, %p76
      %p78 = scmp.ne.s32.totalorder %s67, %s68
      %p79 = scmp.eq.s32.totalorder %s29, 0
      %p80 = por %p78, %p79
      %p81 = scmp.ne.s32.totalorder %s67, %s68
      %p82 = scmp.eq.s32.totalorder %s30, 3
      %p83 = por %p81, %p82
      %p85 = scmp.ne.s32.totalorder %s68, %s84
      %p86 = scmp.eq.s32.totalorder %s30, 0
      %p87 = por %p85, %p86
      %s89 = sadd.s32 %s88, 1
      %p92 = scmp.eq.s32.totalorder %s24, 3
      %p93 = scmp.ne.s32.totalorder %s88, %s90
      %p94 = scmp.eq.s32.totalorder %s24, 0
      %p95 = por %p93, %p94
      %p96 = scmp.ne.s32.totalorder %s88, %s90
      %p97 = scmp.eq.s32.totalorder %s29, 3
      %p98 = por %p96, %p97
      %p99 = scmp.ne.s32.totalorder %s90, %s91
      %p100 = scmp.eq.s32.totalorder %s29, 0
      %p101 = por %p99, %p100
      %p102 = scmp.ne.s32.totalorder %s90, %s91
      %p103 = scmp.eq.s32.totalorder %s30, 3
      %p104 = por %p102, %p103
      %p106 = scmp.ne.s32.totalorder %s91, %s105
      %p107 = scmp.eq.s32.totalorder %s30, 0
      %p108 = por %p106, %p107
      %s110 = sadd.s32 %s109, 1
      %p113 = scmp.eq.s32.totalorder %s24, 3
      %p114 = scmp.ne.s32.totalorder %s109, %s111
      %p115 = scmp.eq.s32.totalorder %s24, 0
      %p116 = por %p114, %p115
      %p117 = scmp.ne.s32.totalorder %s109, %s111
      %p118 = scmp.eq.s32.totalorder %s29, 3
      %p119 = por %p117, %p118
      %p120 = scmp.ne.s32.totalorder %s111, %s112
      %p121 = scmp.eq.s32.totalorder %s29, 0
      %p122 = por %p120, %p121
      %p123 = scmp.ne.s32.totalorder %s111, %s112
      %p124 = scmp.eq.s32.totalorder %s30, 3
      %p125 = por %p123, %p124
      %p127 = scmp.ne.s32.totalorder %s112, %s126
      %p128 = scmp.eq.s32.totalorder %s30, 0
      %p129 = por %p127, %p128
      %s131 = sadd.s32 %s130, 1
      %p134 = scmp.eq.s32.totalorder %s24, 3
      %p135 = scmp.ne.s32.totalorder %s130, %s132
      %p136 = scmp.eq.s32.totalorder %s24, 0
      %p137 = por %p135, %p136
      %p138 = scmp.ne.s32.totalorder %s130, %s132
      %p139 = scmp.eq.s32.totalorder %s29, 3
      %p140 = por %p138, %p139
      %p141 = scmp.ne.s32.totalorder %s132, %s133
      %p142 = scmp.eq.s32.totalorder %s29, 0
      %p143 = por %p141, %p142
      %p144 = scmp.ne.s32.totalorder %s132, %s133
      %p145 = scmp.eq.s32.totalorder %s30, 3
      %p146 = por %p144, %p145
      %p148 = scmp.ne.s32.totalorder %s133, %s147
      %p149 = scmp.eq.s32.totalorder %s30, 0
      %p150 = por %p148, %p149
      %s152 = sadd.s32 %s151, 1
      %p155 = scmp.eq.s32.totalorder %s24, 3
      %p156 = scmp.ne.s32.totalorder %s151, %s153
      %p157 = scmp.eq.s32.totalorder %s24, 0
      %p158 = por %p156, %p157
      %p159 = scmp.ne.s32.totalorder %s151, %s153
      %p160 = scmp.eq.s32.totalorder %s29, 3
      %p161 = por %p159, %p160
      %p162 = scmp.ne.s32.totalorder %s153, %s154
      %p163 = scmp.eq.s32.totalorder %s29, 0
      %p164 = por %p162, %p163
      %p165 = scmp.ne.s32.totalorder %s153, %s154
      %p166 = scmp.eq.s32.totalorder %s30, 3
      %p167 = por %p165, %p166
      %p169 = scmp.ne.s32.totalorder %s154, %s168
      %p170 = scmp.eq.s32.totalorder %s30, 0
      %p171 = por %p169, %p170
      %s173 = sadd.s32 %s172, 1
      %p176 = scmp.eq.s32.totalorder %s24, 3
      %p177 = scmp.ne.s32.totalorder %s172, %s174
      %p178 = scmp.eq.s32.totalorder %s24, 0
      %p179 = por %p177, %p178
      %p180 = scmp.ne.s32.totalorder %s172, %s174
      %p181 = scmp.eq.s32.totalorder %s29, 3
      %p182 = por %p180, %p181
      %p183 = scmp.ne.s32.totalorder %s174, %s175
      %p184 = scmp.eq.s32.totalorder %s29, 0
      %p185 = por %p183, %p184
      %p186 = scmp.ne.s32.totalorder %s174, %s175
      %p187 = scmp.eq.s32.totalorder %s30, 3
      %p188 = por %p186, %p187
      %p190 = scmp.ne.s32.totalorder %s175, %s189
      %p191 = scmp.eq.s32.totalorder %s30, 0
      %p192 = por %p190, %p191
      %s193 = ssub.s32 %s31, %s43
      %p194 = scmp.eq.s32.totalorder %s193, 0
      %s196 = sadd.s32 %s195, 1
      %s197 = scalar_select %p194, %s195, %s196
      %p200 = pneg %p194
      %p201 = scmp.eq.s32.totalorder %s24, 3
      %p202 = por %p200, %p201
      %p203 = scmp.ne.s32.totalorder %s195, %s198
      %p204 = scmp.eq.s32.totalorder %s24, 0
      %p205 = por %p203, %p204
      %p206 = scmp.ne.s32.totalorder %s195, %s198
      %p207 = scmp.eq.s32.totalorder %s29, 3
      %p208 = por %p206, %p207
      %p209 = scmp.ne.s32.totalorder %s198, %s199
      %p210 = scmp.eq.s32.totalorder %s29, 0
      %p211 = por %p209, %p210
      %p212 = scmp.ne.s32.totalorder %s198, %s199
      %p213 = scmp.eq.s32.totalorder %s30, 3
      %p214 = por %p212, %p213
      %p216 = scmp.ne.s32.totalorder %s199, %s215
      %p217 = scmp.eq.s32.totalorder %s30, 0
      %p218 = por %p216, %p217
      %p219 = scmp.le.s32.totalorder 1, %s24
      %p220 = scmp.lt.s32.totalorder %s24, 5
      %p221 = pnand %p219, %p220
      %p222 = pneg %p221
      // Predicated region
      $region9: #{kgat_bi_aggregator.1} parent=5 // pred_check
        _
      $region10: #{kgat_bi_aggregator.1} parent=5 // pred_check_branch
        %224 = sbr.rel (%p221) target = $region12
      $region11: #{kgat_bi_aggregator.1} parent=5 // pred_region
        %s225 = ssub.s32 %s24, 1
        // Predicated region
        $region13: #{kgat_bi_aggregator.1} parent=11 // pred_check
          %p226 = pneg %p101
        $region14: #{kgat_bi_aggregator.1} parent=11 // pred_check_branch
          %228 = sbr.rel (%p226) target = $region16
        $region15: #{kgat_bi_aggregator.1} parent=11 // pred_region
          _
        $region16: #{kgat_bi_aggregator.1} parent=11 // pred_fallthru
          _
        // Predicated region
        $region17: #{kgat_bi_aggregator.1} parent=11 // pred_check
          %p229 = pneg %p122
        $region18: #{kgat_bi_aggregator.1} parent=11 // pred_check_branch
          %231 = sbr.rel (%p229) target = $region20
        $region19: #{kgat_bi_aggregator.1} parent=11 // pred_region
          _
        $region20: #{kgat_bi_aggregator.1} parent=11 // pred_fallthru
          _
        // Predicated region
        $region21: #{kgat_bi_aggregator.1} parent=11 // pred_check
          %p232 = pneg %p143
        $region22: #{kgat_bi_aggregator.1} parent=11 // pred_check_branch
          %234 = sbr.rel (%p232) target = $region24
        $region23: #{kgat_bi_aggregator.1} parent=11 // pred_region
          _
        $region24: #{kgat_bi_aggregator.1} parent=11 // pred_fallthru
          _
        // Predicated region
        $region25: #{kgat_bi_aggregator.1} parent=11 // pred_check
          %p235 = pneg %p164
        $region26: #{kgat_bi_aggregator.1} parent=11 // pred_check_branch
          %237 = sbr.rel (%p235) target = $region28
        $region27: #{kgat_bi_aggregator.1} parent=11 // pred_region
          _
        $region28: #{kgat_bi_aggregator.1} parent=11 // pred_fallthru
          _
        // Predicated region
        $region29: #{kgat_bi_aggregator.1} parent=11 // pred_check
          %p238 = pneg %p185
        $region30: #{kgat_bi_aggregator.1} parent=11 // pred_check_branch
          %240 = sbr.rel (%p238) target = $region32
        $region31: #{kgat_bi_aggregator.1} parent=11 // pred_region
          _
        $region32: #{kgat_bi_aggregator.1} parent=11 // pred_fallthru
          _
      $region12: #{kgat_bi_aggregator.1} parent=5 // pred_fallthru
        _
      %p241 = scmp.lt.s32.totalorder %s24, 4
      // Predicated region
      $region33: #{kgat_bi_aggregator.1} parent=5 // pred_check
        %p242 = pneg %p241
      $region34: #{kgat_bi_aggregator.1} parent=5 // pred_check_branch
        %244 = sbr.rel (%p242) target = $region36
      $region35: #{kgat_bi_aggregator.1} parent=5 // pred_region
        // Predicated region
        $region37: #{kgat_bi_aggregator.1} parent=35 // pred_check
          %p245 = pneg %p74
        $region38: #{kgat_bi_aggregator.1} parent=35 // pred_check_branch
          %247 = sbr.rel (%p245) target = $region40
        $region39: #{kgat_bi_aggregator.1} parent=35 // pred_region
          %s248 = sand.u32 %s64, 1
          %s249 = sand.u32 %s64, 1
          %s250 = smul.addr %s249, 64
          %s251 = scalar_lea.vmem [#allocation6], %s250
          %s252 = sshra.s32 %s32, 7
          %s253 = sand.u32 %s32, 127
          %s254 = sadd.s32 %s252, %s31
          %s255 = smul.u32 %s254, 128
          %s256 = sshra.s32 %s32, 7
          %s257 = sand.u32 %s32, 127
          %s258 = sadd.s32 %s255, %s257
          %s259 = sld [smem:[#allocation5 + %s258]]
          %s260 = smul.u32 16, %s31
          %s261 = smul.addr %s260, 2
          %s262 = sadd.s32 %s259, %s261
          %s263 = smul.addr %s262, 4
          %s264 = scalar_lea.vmem %s2, %s263
          // Predicated region
          $region41: #{kgat_bi_aggregator.1} parent=39 // pred_check
            _
          $region42: #{kgat_bi_aggregator.1} parent=39 // pred_check_branch
            %266 = sbr.rel (0) target = $region44
          $region43: #{kgat_bi_aggregator.1} parent=39 // pred_region
            // Predicated region
            $region45: #{kgat_bi_aggregator.1} parent=43 // pred_check
              _
            $region46: #{kgat_bi_aggregator.1} parent=43 // pred_check_branch
              %268 = sbr.rel target = $region48
            $region47: #{kgat_bi_aggregator.1} parent=43 // pred_region
              // Predicated region
              $region60: #{kgat_bi_aggregator.1} parent=47 // pred_check
                _
              $region61: #{kgat_bi_aggregator.1} parent=47 // pred_check_branch
                %314 = sbr.rel (0) target = $region63
              $region62: #{kgat_bi_aggregator.1} parent=47 // pred_region
                loop: start=0, step=1, limit=1
                $region64: #{kgat_bi_aggregator.1} parent=62 // loop_pre_header
                  _
                $region65: #{kgat_bi_aggregator.1} parent=62 // loop_header
                  %s316 = sphi 0, %s320
                  %p317 = scmp.ge.s32.totalorder %s316, 1
                  %s321 = sphi %s264, %s264
                  %s322 = sphi %s251, %s251
                $region66: #{kgat_bi_aggregator.1} parent=62 // loop_header_branch
                  %319 = sbr.rel (%p317) target = $region70
                $region67: #{kgat_bi_aggregator.1} parent=62 // loop_body
                  _
                $region68: #{kgat_bi_aggregator.1} parent=62 // loop_footer
                  %s320 = sadd.s32 1, %s316
                $region69: #{kgat_bi_aggregator.1} parent=62 // loop_footer_branch
                  %315 = sbr.rel target = $region65
                $region70: #{kgat_bi_aggregator.1} parent=62 // loop_exit
                  _
                %s324 = ssub.s32 16, 1
                loop: start=0, step=1, limit=1
                $region71: #{kgat_bi_aggregator.1} parent=62 // loop_pre_header
                  _
                $region72: #{kgat_bi_aggregator.1} parent=62 // loop_header
                  %s326 = sphi 0, %s330
                  %p327 = scmp.ge.s32.totalorder %s326, 1
                  %s331 = sphi %s264, %s264
                  %s332 = sphi %s251, %s251
                $region73: #{kgat_bi_aggregator.1} parent=62 // loop_header_branch
                  %329 = sbr.rel (%p327) target = $region77
                $region74: #{kgat_bi_aggregator.1} parent=62 // loop_body
                  %v333 = vld [vmem:[%s331] sm:%s324]
                  %334 = vst [vmem:[%s332] sm:%s324] %v333
                  %v335 = vld [vmem:[%s331 + $0x8] sm:%s324]
                  %336 = vst [vmem:[%s332 + $0x4] sm:%s324] %v335
                  %v337 = vld [vmem:[%s331 + $0x10] sm:%s324]
                  %338 = vst [vmem:[%s332 + $0x8] sm:%s324] %v337
                  %v339 = vld [vmem:[%s331 + $0x18] sm:%s324]
                  %340 = vst [vmem:[%s332 + $0xc] sm:%s324] %v339
                  %v341 = vld [vmem:[%s331 + $0x20] sm:%s324]
                  %342 = vst [vmem:[%s332 + $0x10] sm:%s324] %v341
                  %v343 = vld [vmem:[%s331 + $0x28] sm:%s324]
                  %344 = vst [vmem:[%s332 + $0x14] sm:%s324] %v343
                  %v345 = vld [vmem:[%s331 + $0x30] sm:%s324]
                  %346 = vst [vmem:[%s332 + $0x18] sm:%s324] %v345
                  %v347 = vld [vmem:[%s331 + $0x38] sm:%s324]
                  %348 = vst [vmem:[%s332 + $0x1c] sm:%s324] %v347
                  %v349 = vld [vmem:[%s331 + $0x40] sm:%s324]
                  %350 = vst [vmem:[%s332 + $0x20] sm:%s324] %v349
                  %v351 = vld [vmem:[%s331 + $0x48] sm:%s324]
                  %352 = vst [vmem:[%s332 + $0x24] sm:%s324] %v351
                  %v353 = vld [vmem:[%s331 + $0x50] sm:%s324]
                  %354 = vst [vmem:[%s332 + $0x28] sm:%s324] %v353
                  %v355 = vld [vmem:[%s331 + $0x58] sm:%s324]
                  %356 = vst [vmem:[%s332 + $0x2c] sm:%s324] %v355
                  %v357 = vld [vmem:[%s331 + $0x60] sm:%s324]
                  %358 = vst [vmem:[%s332 + $0x30] sm:%s324] %v357
                  %v359 = vld [vmem:[%s331 + $0x68] sm:%s324]
                  %360 = vst [vmem:[%s332 + $0x34] sm:%s324] %v359
                  %v361 = vld [vmem:[%s331 + $0x70] sm:%s324]
                  %362 = vst [vmem:[%s332 + $0x38] sm:%s324] %v361
                  %v363 = vld [vmem:[%s331 + $0x78] sm:%s324]
                  %364 = vst [vmem:[%s332 + $0x3c] sm:%s324] %v363
                $region75: #{kgat_bi_aggregator.1} parent=62 // loop_footer
                  %s330 = sadd.s32 1, %s326
                $region76: #{kgat_bi_aggregator.1} parent=62 // loop_footer_branch
                  %325 = sbr.rel target = $region72
                $region77: #{kgat_bi_aggregator.1} parent=62 // loop_exit
                  _
              $region63: #{kgat_bi_aggregator.1} parent=47 // pred_fallthru
                _
            $region48: #{kgat_bi_aggregator.1} parent=43 // pred_fallthru
              _
            // Predicated region
            $region49: #{kgat_bi_aggregator.1} parent=43 // pred_check
              _
            $region50: #{kgat_bi_aggregator.1} parent=43 // pred_check_branch
              %270 = sbr.rel (0) target = $region52
            $region51: #{kgat_bi_aggregator.1} parent=43 // pred_region
              %s272 = ssub.s32 16, 1
              loop: start=0, step=1, limit=1
              $region53: #{kgat_bi_aggregator.1} parent=51 // loop_pre_header
                _
              $region54: #{kgat_bi_aggregator.1} parent=51 // loop_header
                %s274 = sphi 0, %s278
                %p275 = scmp.ge.s32.totalorder %s274, 1
                %s279 = sphi %s264, %s264
                %s280 = sphi %s251, %s251
              $region55: #{kgat_bi_aggregator.1} parent=51 // loop_header_branch
                %277 = sbr.rel (%p275) target = $region59
              $region56: #{kgat_bi_aggregator.1} parent=51 // loop_body
                %v281 = vld [vmem:[%s279] sm:%s272]
                %282 = vst [vmem:[%s280] sm:%s272] %v281
                %v283 = vld [vmem:[%s279 + $0x8] sm:%s272]
                %284 = vst [vmem:[%s280 + $0x4] sm:%s272] %v283
                %v285 = vld [vmem:[%s279 + $0x10] sm:%s272]
                %286 = vst [vmem:[%s280 + $0x8] sm:%s272] %v285
                %v287 = vld [vmem:[%s279 + $0x18] sm:%s272]
                %288 = vst [vmem:[%s280 + $0xc] sm:%s272] %v287
                %v289 = vld [vmem:[%s279 + $0x20] sm:%s272]
                %290 = vst [vmem:[%s280 + $0x10] sm:%s272] %v289
                %v291 = vld [vmem:[%s279 + $0x28] sm:%s272]
                %292 = vst [vmem:[%s280 + $0x14] sm:%s272] %v291
                %v293 = vld [vmem:[%s279 + $0x30] sm:%s272]
                %294 = vst [vmem:[%s280 + $0x18] sm:%s272] %v293
                %v295 = vld [vmem:[%s279 + $0x38] sm:%s272]
                %296 = vst [vmem:[%s280 + $0x1c] sm:%s272] %v295
                %v297 = vld [vmem:[%s279 + $0x40] sm:%s272]
                %298 = vst [vmem:[%s280 + $0x20] sm:%s272] %v297
                %v299 = vld [vmem:[%s279 + $0x48] sm:%s272]
                %300 = vst [vmem:[%s280 + $0x24] sm:%s272] %v299
                %v301 = vld [vmem:[%s279 + $0x50] sm:%s272]
                %302 = vst [vmem:[%s280 + $0x28] sm:%s272] %v301
                %v303 = vld [vmem:[%s279 + $0x58] sm:%s272]
                %304 = vst [vmem:[%s280 + $0x2c] sm:%s272] %v303
                %v305 = vld [vmem:[%s279 + $0x60] sm:%s272]
                %306 = vst [vmem:[%s280 + $0x30] sm:%s272] %v305
                %v307 = vld [vmem:[%s279 + $0x68] sm:%s272]
                %308 = vst [vmem:[%s280 + $0x34] sm:%s272] %v307
                %v309 = vld [vmem:[%s279 + $0x70] sm:%s272]
                %310 = vst [vmem:[%s280 + $0x38] sm:%s272] %v309
                %v311 = vld [vmem:[%s279 + $0x78] sm:%s272]
                %312 = vst [vmem:[%s280 + $0x3c] sm:%s272] %v311
              $region57: #{kgat_bi_aggregator.1} parent=51 // loop_footer
                %s278 = sadd.s32 1, %s274
              $region58: #{kgat_bi_aggregator.1} parent=51 // loop_footer_branch
                %273 = sbr.rel target = $region54
              $region59: #{kgat_bi_aggregator.1} parent=51 // loop_exit
                _
            $region52: #{kgat_bi_aggregator.1} parent=43 // pred_fallthru
              _
          $region44: #{kgat_bi_aggregator.1} parent=39 // pred_fallthru
            _
          %365 = vnop
        $region40: #{kgat_bi_aggregator.1} parent=35 // pred_fallthru
          _
      $region36: #{kgat_bi_aggregator.1} parent=5 // pred_fallthru
        _
      %p366 = scmp.le.s32.totalorder 1, %s24
      %p367 = scmp.lt.s32.totalorder %s24, 5
      %p368 = pnand %p366, %p367
      %p369 = pneg %p368
      // Predicated region
      $region78: #{kgat_bi_aggregator.1} parent=5 // pred_check
        _
      $region79: #{kgat_bi_aggregator.1} parent=5 // pred_check_branch
        %371 = sbr.rel (%p368) target = $region81
      $region80: #{kgat_bi_aggregator.1} parent=5 // pred_region
        %s372 = ssub.s32 %s24, 1
        %s373 = sand.u32 %s67, 1
        %s374 = sand.u32 %s67, 1
        %s375 = smul.addr %s374, 64
        %s376 = scalar_lea.vmem [#allocation6], %s375
        // Predicated region
        $region82: #{kgat_bi_aggregator.1} parent=80 // pred_check
          %p377 = pneg %p80
        $region83: #{kgat_bi_aggregator.1} parent=80 // pred_check_branch
          %379 = sbr.rel (%p377) target = $region85
        $region84: #{kgat_bi_aggregator.1} parent=80 // pred_region
          _
        $region85: #{kgat_bi_aggregator.1} parent=80 // pred_fallthru
          _
        %s380 = sand.u32 %s67, 1
        %s381 = sand.u32 %s67, 1
        %s382 = smul.addr %s381, 64
        %s383 = scalar_lea.vmem [#allocation6], %s382
        %p384 = pneg %p80
        %p385 = pneg %p77
        %p386 = pneg %p101
        %p387 = pneg %p98
        %p388 = pneg %p122
        %p389 = pneg %p119
        %p390 = pneg %p143
        %p391 = pneg %p140
        %p392 = pneg %p164
        %p393 = pneg %p161
        %p394 = pneg %p185
        %p395 = pneg %p182
        %p396 = pneg %p211
        %p397 = pneg %p208
        %s398 = smul.u32 16, %s33
        %p399 = scmp.lt.s32.totalorder %s398, 31
        %s400 = scalar_select %p399, %s398, 31
        %s401 = smul.addr %s400, 8
        %s402 = scalar_lea.vmem %s8, %s401
        %s403 = sshra.s32 %s34, 7
        %s404 = sand.u32 %s34, 127
        %s405 = sadd.s32 %s403, %s33
        %s406 = smul.u32 %s405, 128
        %s407 = sshra.s32 %s34, 7
        %s408 = sand.u32 %s34, 127
        %s409 = sadd.s32 %s406, %s408
        %s410 = sld [smem:[#allocation5 + %s409]]
        %s411 = smul.u32 16, %s33
        %s412 = smul.u32 16, %s33
        %p413 = scmp.lt.s32.totalorder %s412, 31
        %s414 = scalar_select %p413, %s412, 31
        %s415 = smul.addr %s414, 8
        %s416 = scalar_lea.vmem %s8, %s415
        %s417 = smul.u32 16, %s33
        %p419 = scmp.eq.s32.totalorder %s34, 0
        // Predicated region
        $region86: #{kgat_bi_aggregator.1} parent=80 // pred_check
          %p420 = pneg %p419
        $region87: #{kgat_bi_aggregator.1} parent=80 // pred_check_branch
          %422 = sbr.rel (%p420) target = $region89
        $region88: #{kgat_bi_aggregator.1} parent=80 // pred_region
          %423 = vst [vmem:[#allocation2] sm:$0xff] 0.0
          %424 = vst [vmem:[#allocation2 + $0x8] sm:$0xff] 0.0
          %425 = vst [vmem:[#allocation2 + $0x10] sm:$0xff] 0.0
          %426 = vst [vmem:[#allocation2 + $0x18] sm:$0xff] 0.0
          %427 = vst [vmem:[#allocation2 + $0x20] sm:$0xff] 0.0
          %428 = vst [vmem:[#allocation2 + $0x28] sm:$0xff] 0.0
          %429 = vst [vmem:[#allocation2 + $0x30] sm:$0xff] 0.0
          %430 = vst [vmem:[#allocation2 + $0x38] sm:$0xff] 0.0
          %431 = vst [vmem:[#allocation2 + $0x40] sm:$0xff] 0.0
          %432 = vst [vmem:[#allocation2 + $0x48] sm:$0xff] 0.0
          %433 = vst [vmem:[#allocation2 + $0x50] sm:$0xff] 0.0
          %434 = vst [vmem:[#allocation2 + $0x58] sm:$0xff] 0.0
          %435 = vst [vmem:[#allocation2 + $0x60] sm:$0xff] 0.0
          %436 = vst [vmem:[#allocation2 + $0x68] sm:$0xff] 0.0
          %437 = vst [vmem:[#allocation2 + $0x70] sm:$0xff] 0.0
          %438 = vst [vmem:[#allocation2 + $0x78] sm:$0xff] 0.0
        $region89: #{kgat_bi_aggregator.1} parent=80 // pred_fallthru
          _
        %s439 = sshra.s32 %s34, 7
        %s440 = sand.u32 %s34, 127
        %s441 = sadd.s32 %s439, %s33
        %s442 = smul.u32 %s441, 128
        %s443 = sshra.s32 %s34, 7
        %s444 = sand.u32 %s34, 127
        %s445 = sadd.s32 %s442, %s444
        %s446 = sld [smem:[#allocation4 + %s445]]
        %p447 = scmp.gt.s32.totalorder %s446, 0
        // Predicated region
        $region90: #{kgat_bi_aggregator.1} parent=80 // pred_check
          %p448 = pneg %p447
        $region91: #{kgat_bi_aggregator.1} parent=80 // pred_check_branch
          %450 = sbr.rel (%p448) target = $region93
        $region92: #{kgat_bi_aggregator.1} parent=80 // pred_region
          %s451 = smul.u32 %s34, 128
          %s452 = sshra.s32 %s451, 3
          %s453 = sand.u32 %s451, 7
          %s454 = smul.addr %s452, 4
          %s455 = scalar_lea.vmem %s3, %s454
          %v456 = vld [vmem:[%s455] sm:$0xf]
          %v457 = vld [vmem:[%s455 + $0x4] sm:$0xf]
          %v458 = vld [vmem:[%s455 + $0x8] sm:$0xf]
          %v459 = vld [vmem:[%s455 + $0xc] sm:$0xf]
          %v460 = vld [vmem:[%s455 + $0x10] sm:$0xf]
          %v461 = vld [vmem:[%s455 + $0x14] sm:$0xf]
          %v462 = vld [vmem:[%s455 + $0x18] sm:$0xf]
          %v463 = vld [vmem:[%s455 + $0x1c] sm:$0xf]
          %v464 = vld [vmem:[%s455 + $0x20] sm:$0xf]
          %v465 = vld [vmem:[%s455 + $0x24] sm:$0xf]
          %v466 = vld [vmem:[%s455 + $0x28] sm:$0xf]
          %v467 = vld [vmem:[%s455 + $0x2c] sm:$0xf]
          %v468 = vld [vmem:[%s455 + $0x30] sm:$0xf]
          %v469 = vld [vmem:[%s455 + $0x34] sm:$0xf]
          %v470 = vld [vmem:[%s455 + $0x38] sm:$0xf]
          %v471 = vld [vmem:[%s455 + $0x3c] sm:$0xf]
          %v472 = vld [vmem:[#allocation2] sm:$0xff]
          %v473 = vld [vmem:[#allocation2 + $0x8] sm:$0xff]
          %v474 = vld [vmem:[#allocation2 + $0x10] sm:$0xff]
          %v475 = vld [vmem:[#allocation2 + $0x18] sm:$0xff]
          %v476 = vld [vmem:[#allocation2 + $0x20] sm:$0xff]
          %v477 = vld [vmem:[#allocation2 + $0x28] sm:$0xff]
          %v478 = vld [vmem:[#allocation2 + $0x30] sm:$0xff]
          %v479 = vld [vmem:[#allocation2 + $0x38] sm:$0xff]
          %v480 = vld [vmem:[#allocation2 + $0x40] sm:$0xff]
          %v481 = vld [vmem:[#allocation2 + $0x48] sm:$0xff]
          %v482 = vld [vmem:[#allocation2 + $0x50] sm:$0xff]
          %v483 = vld [vmem:[#allocation2 + $0x58] sm:$0xff]
          %v484 = vld [vmem:[#allocation2 + $0x60] sm:$0xff]
          %v485 = vld [vmem:[#allocation2 + $0x68] sm:$0xff]
          %v486 = vld [vmem:[#allocation2 + $0x70] sm:$0xff]
          %v487 = vld [vmem:[#allocation2 + $0x78] sm:$0xff]
          %v488 = vld [vmem:[%s376] sm:$0xf]
          %v489 = vld [vmem:[%s376 + $0x4] sm:$0xf]
          %v490 = vld [vmem:[%s376 + $0x8] sm:$0xf]
          %v491 = vld [vmem:[%s376 + $0xc] sm:$0xf]
          %v492 = vld [vmem:[%s376 + $0x10] sm:$0xf]
          %v493 = vld [vmem:[%s376 + $0x14] sm:$0xf]
          %v494 = vld [vmem:[%s376 + $0x18] sm:$0xf]
          %v495 = vld [vmem:[%s376 + $0x1c] sm:$0xf]
          %v496 = vld [vmem:[%s376 + $0x20] sm:$0xf]
          %v497 = vld [vmem:[%s376 + $0x24] sm:$0xf]
          %v498 = vld [vmem:[%s376 + $0x28] sm:$0xf]
          %v499 = vld [vmem:[%s376 + $0x2c] sm:$0xf]
          %v500 = vld [vmem:[%s376 + $0x30] sm:$0xf]
          %v501 = vld [vmem:[%s376 + $0x34] sm:$0xf]
          %v502 = vld [vmem:[%s376 + $0x38] sm:$0xf]
          %v503 = vld [vmem:[%s376 + $0x3c] sm:$0xf]
          %v520 = vunpack.c.l.b16 %v488
          %v521 = vunpack.c.l.b16 %v489
          %v522 = vunpack.c.l.b16 %v490
          %v523 = vunpack.c.l.b16 %v491
          %v524 = vunpack.c.l.b16 %v492
          %v525 = vunpack.c.l.b16 %v493
          %v526 = vunpack.c.l.b16 %v494
          %v527 = vunpack.c.l.b16 %v495
          %v528 = vunpack.c.l.b16 %v496
          %v529 = vunpack.c.l.b16 %v497
          %v530 = vunpack.c.l.b16 %v498
          %v531 = vunpack.c.l.b16 %v499
          %v532 = vunpack.c.l.b16 %v500
          %v533 = vunpack.c.l.b16 %v501
          %v534 = vunpack.c.l.b16 %v502
          %v535 = vunpack.c.l.b16 %v503
          %v536 = vpack.c.b16 %v521, %v520
          %v537 = vpack.c.b16 %v523, %v522
          %v538 = vpack.c.b16 %v525, %v524
          %v539 = vpack.c.b16 %v527, %v526
          %v540 = vpack.c.b16 %v529, %v528
          %v541 = vpack.c.b16 %v531, %v530
          %v542 = vpack.c.b16 %v533, %v532
          %v543 = vpack.c.b16 %v535, %v534
          %v568 = vunpack.c.l.b16 %v456
          %v569 = vunpack.c.l.b16 %v457
          %v570 = vunpack.c.l.b16 %v458
          %v571 = vunpack.c.l.b16 %v459
          %v572 = vunpack.c.l.b16 %v460
          %v573 = vunpack.c.l.b16 %v461
          %v574 = vunpack.c.l.b16 %v462
          %v575 = vunpack.c.l.b16 %v463
          %v576 = vunpack.c.l.b16 %v464
          %v577 = vunpack.c.l.b16 %v465
          %v578 = vunpack.c.l.b16 %v466
          %v579 = vunpack.c.l.b16 %v467
          %v580 = vunpack.c.l.b16 %v468
          %v581 = vunpack.c.l.b16 %v469
          %v582 = vunpack.c.l.b16 %v470
          %v583 = vunpack.c.l.b16 %v471
          %v584 = vpack.c.b16 %v569, %v568
          %v585 = vpack.c.b16 %v571, %v570
          %v586 = vpack.c.b16 %v573, %v572
          %v587 = vpack.c.b16 %v575, %v574
          %v588 = vpack.c.b16 %v577, %v576
          %v589 = vpack.c.b16 %v579, %v578
          %v590 = vpack.c.b16 %v581, %v580
          %v591 = vpack.c.b16 %v583, %v582
          %600 = vmatprep.subr.bf16.mxu0 0
          %601 = vmatpush1.bf16.msra.mxu0 %v591
          %602 = vmatprep.subr.bf16.mxu0 0
          %603 = vmatpush1.bf16.msra.mxu0 %v590
          %604 = vmatprep.subr.bf16.mxu0 0
          %605 = vmatpush1.bf16.msra.mxu0 %v589
          %606 = vmatprep.subr.bf16.mxu0 0
          %607 = vmatpush1.bf16.msra.mxu0 %v588
          %608 = vmatprep.subr.bf16.mxu0 0
          %609 = vmatpush1.bf16.msra.mxu0 %v587
          %610 = vmatprep.subr.bf16.mxu0 0
          %611 = vmatpush1.bf16.msra.mxu0 %v586
          %612 = vmatprep.subr.bf16.mxu0 0
          %613 = vmatpush1.bf16.msra.mxu0 %v585
          %614 = vmatprep.subr.bf16.mxu0 0
          %615 = vmatpush1.bf16.msra.mxu0 %v584
          %616 = vmatprep.subr.bf16.mxu0 0
          %617 = vmatpush2.bf16.msra.mxu0 0
          %618 = vmatprep.subr.bf16.mxu0 0
          %619 = vmatpush2.bf16.msra.mxu0 0
          %620 = vmatprep.subr.bf16.mxu0 0
          %621 = vmatpush2.bf16.msra.mxu0 0
          %622 = vmatprep.subr.bf16.mxu0 0
          %623 = vmatpush2.bf16.msra.mxu0 0
          %624 = vmatprep.subr.bf16.mxu0 0
          %625 = vmatpush2.bf16.msra.mxu0 0
          %626 = vmatprep.subr.bf16.mxu0 0
          %627 = vmatpush2.bf16.msra.mxu0 0
          %628 = vmatprep.subr.bf16.mxu0 0
          %629 = vmatpush2.bf16.msra.mxu0 0
          %630 = vmatprep.subr.bf16.mxu0 0
          %631 = vmatpush2.bf16.msra.mxu0 0
          %632 = vmatprep.mubr.bf16.mxu0 0
          %633 = vmatmul.mubr.bf16.gmra.mxu0 %v536
          %v634 = vpop.f32.mrf.mxu0
          %v635 = vadd.f32 0.0, %v634
          %v636 = vpop.f32.mrf.mxu0
          %v637 = vpop.f32.mrf.mxu0
          %v638 = vadd.f32 0.0, %v637
          %v639 = vpop.f32.mrf.mxu0
          %640 = vmatprep.mubr.bf16.mxu0 0
          %641 = vmatmul.mubr.bf16.gmra.mxu0 %v537
          %v642 = vpop.f32.mrf.mxu0
          %v643 = vadd.f32 0.0, %v642
          %v644 = vpop.f32.mrf.mxu0
          %v645 = vpop.f32.mrf.mxu0
          %v646 = vadd.f32 0.0, %v645
          %v647 = vpop.f32.mrf.mxu0
          %648 = vmatprep.mubr.bf16.mxu0 0
          %649 = vmatmul.mubr.bf16.gmra.mxu0 %v538
          %v650 = vpop.f32.mrf.mxu0
          %v651 = vadd.f32 0.0, %v650
          %v652 = vpop.f32.mrf.mxu0
          %v653 = vpop.f32.mrf.mxu0
          %v654 = vadd.f32 0.0, %v653
          %v655 = vpop.f32.mrf.mxu0
          %656 = vmatprep.mubr.bf16.mxu0 0
          %657 = vmatmul.mubr.bf16.gmra.mxu0 %v539
          %v658 = vpop.f32.mrf.mxu0
          %v659 = vadd.f32 0.0, %v658
          %v660 = vpop.f32.mrf.mxu0
          %v661 = vpop.f32.mrf.mxu0
          %v662 = vadd.f32 0.0, %v661
          %v663 = vpop.f32.mrf.mxu0
          %664 = vmatprep.mubr.bf16.mxu0 0
          %665 = vmatmul.mubr.bf16.gmra.mxu0 %v540
          %v666 = vpop.f32.mrf.mxu0
          %v667 = vadd.f32 0.0, %v666
          %v668 = vpop.f32.mrf.mxu0
          %v669 = vpop.f32.mrf.mxu0
          %v670 = vadd.f32 0.0, %v669
          %v671 = vpop.f32.mrf.mxu0
          %672 = vmatprep.mubr.bf16.mxu0 0
          %673 = vmatmul.mubr.bf16.gmra.mxu0 %v541
          %v674 = vpop.f32.mrf.mxu0
          %v675 = vadd.f32 0.0, %v674
          %v676 = vpop.f32.mrf.mxu0
          %v677 = vpop.f32.mrf.mxu0
          %v678 = vadd.f32 0.0, %v677
          %v679 = vpop.f32.mrf.mxu0
          %680 = vmatprep.mubr.bf16.mxu0 0
          %681 = vmatmul.mubr.bf16.gmra.mxu0 %v542
          %v682 = vpop.f32.mrf.mxu0
          %v683 = vadd.f32 0.0, %v682
          %v684 = vpop.f32.mrf.mxu0
          %v685 = vpop.f32.mrf.mxu0
          %v686 = vadd.f32 0.0, %v685
          %v687 = vpop.f32.mrf.mxu0
          %688 = vmatprep.mubr.bf16.mxu0 0
          %689 = vmatmul.mubr.bf16.gmra.mxu0 %v543
          %v690 = vpop.f32.mrf.mxu0
          %v691 = vadd.f32 0.0, %v690
          %v692 = vpop.f32.mrf.mxu0
          %v693 = vpop.f32.mrf.mxu0
          %v694 = vadd.f32 0.0, %v693
          %v695 = vpop.f32.mrf.mxu0
          %696 = vdwg.mxu0
          %v697 = vadd.f32 %v472, %v635
          %v698 = vadd.f32 %v473, %v638
          %v699 = vadd.f32 %v474, %v643
          %v700 = vadd.f32 %v475, %v646
          %v701 = vadd.f32 %v476, %v651
          %v702 = vadd.f32 %v477, %v654
          %v703 = vadd.f32 %v478, %v659
          %v704 = vadd.f32 %v479, %v662
          %v705 = vadd.f32 %v480, %v667
          %v706 = vadd.f32 %v481, %v670
          %v707 = vadd.f32 %v482, %v675
          %v708 = vadd.f32 %v483, %v678
          %v709 = vadd.f32 %v484, %v683
          %v710 = vadd.f32 %v485, %v686
          %v711 = vadd.f32 %v486, %v691
          %v712 = vadd.f32 %v487, %v694
          %713 = vst [vmem:[#allocation2] sm:$0xff] %v697
          %714 = vst [vmem:[#allocation2 + $0x8] sm:$0xff] %v698
          %715 = vst [vmem:[#allocation2 + $0x10] sm:$0xff] %v699
          %716 = vst [vmem:[#allocation2 + $0x18] sm:$0xff] %v700
          %717 = vst [vmem:[#allocation2 + $0x20] sm:$0xff] %v701
          %718 = vst [vmem:[#allocation2 + $0x28] sm:$0xff] %v702
          %719 = vst [vmem:[#allocation2 + $0x30] sm:$0xff] %v703
          %720 = vst [vmem:[#allocation2 + $0x38] sm:$0xff] %v704
          %721 = vst [vmem:[#allocation2 + $0x40] sm:$0xff] %v705
          %722 = vst [vmem:[#allocation2 + $0x48] sm:$0xff] %v706
          %723 = vst [vmem:[#allocation2 + $0x50] sm:$0xff] %v707
          %724 = vst [vmem:[#allocation2 + $0x58] sm:$0xff] %v708
          %725 = vst [vmem:[#allocation2 + $0x60] sm:$0xff] %v709
          %726 = vst [vmem:[#allocation2 + $0x68] sm:$0xff] %v710
          %727 = vst [vmem:[#allocation2 + $0x70] sm:$0xff] %v711
          %728 = vst [vmem:[#allocation2 + $0x78] sm:$0xff] %v712
        $region93: #{kgat_bi_aggregator.1} parent=80 // pred_fallthru
          _
        %p729 = scmp.eq.s32.totalorder %s34, 1
        // Predicated region
        $region94: #{kgat_bi_aggregator.1} parent=80 // pred_check
          %p730 = pneg %p729
        $region95: #{kgat_bi_aggregator.1} parent=80 // pred_check_branch
          %732 = sbr.rel (%p730) target = $region97
        $region96: #{kgat_bi_aggregator.1} parent=80 // pred_region
          %s733 = smul.u32 %s33, 128
          %s734 = sshra.s32 %s733, 3
          %s735 = sand.u32 %s733, 7
          %s736 = smul.addr %s734, 4
          %s737 = scalar_lea.vmem %s3, %s736
          %v738 = vld [vmem:[%s737] sm:$0xf]
          %v739 = vld [vmem:[%s737 + $0x4] sm:$0xf]
          %v740 = vld [vmem:[%s737 + $0x8] sm:$0xf]
          %v741 = vld [vmem:[%s737 + $0xc] sm:$0xf]
          %v742 = vld [vmem:[%s737 + $0x10] sm:$0xf]
          %v743 = vld [vmem:[%s737 + $0x14] sm:$0xf]
          %v744 = vld [vmem:[%s737 + $0x18] sm:$0xf]
          %v745 = vld [vmem:[%s737 + $0x1c] sm:$0xf]
          %v746 = vld [vmem:[%s737 + $0x20] sm:$0xf]
          %v747 = vld [vmem:[%s737 + $0x24] sm:$0xf]
          %v748 = vld [vmem:[%s737 + $0x28] sm:$0xf]
          %v749 = vld [vmem:[%s737 + $0x2c] sm:$0xf]
          %v750 = vld [vmem:[%s737 + $0x30] sm:$0xf]
          %v751 = vld [vmem:[%s737 + $0x34] sm:$0xf]
          %v752 = vld [vmem:[%s737 + $0x38] sm:$0xf]
          %v753 = vld [vmem:[%s737 + $0x3c] sm:$0xf]
          %v754 = vunpack.c.l.bf16 %v738
          %v755 = vunpack.c.l.bf16 %v739
          %v756 = vunpack.c.l.bf16 %v740
          %v757 = vunpack.c.l.bf16 %v741
          %v758 = vunpack.c.l.bf16 %v742
          %v759 = vunpack.c.l.bf16 %v743
          %v760 = vunpack.c.l.bf16 %v744
          %v761 = vunpack.c.l.bf16 %v745
          %v762 = vunpack.c.l.bf16 %v746
          %v763 = vunpack.c.l.bf16 %v747
          %v764 = vunpack.c.l.bf16 %v748
          %v765 = vunpack.c.l.bf16 %v749
          %v766 = vunpack.c.l.bf16 %v750
          %v767 = vunpack.c.l.bf16 %v751
          %v768 = vunpack.c.l.bf16 %v752
          %v769 = vunpack.c.l.bf16 %v753
          %v770 = vld [vmem:[#allocation2] sm:$0xff]
          %v771 = vld [vmem:[#allocation2 + $0x8] sm:$0xff]
          %v772 = vld [vmem:[#allocation2 + $0x10] sm:$0xff]
          %v773 = vld [vmem:[#allocation2 + $0x18] sm:$0xff]
          %v774 = vld [vmem:[#allocation2 + $0x20] sm:$0xff]
          %v775 = vld [vmem:[#allocation2 + $0x28] sm:$0xff]
          %v776 = vld [vmem:[#allocation2 + $0x30] sm:$0xff]
          %v777 = vld [vmem:[#allocation2 + $0x38] sm:$0xff]
          %v778 = vld [vmem:[#allocation2 + $0x40] sm:$0xff]
          %v779 = vld [vmem:[#allocation2 + $0x48] sm:$0xff]
          %v780 = vld [vmem:[#allocation2 + $0x50] sm:$0xff]
          %v781 = vld [vmem:[#allocation2 + $0x58] sm:$0xff]
          %v782 = vld [vmem:[#allocation2 + $0x60] sm:$0xff]
          %v783 = vld [vmem:[#allocation2 + $0x68] sm:$0xff]
          %v784 = vld [vmem:[#allocation2 + $0x70] sm:$0xff]
          %v785 = vld [vmem:[#allocation2 + $0x78] sm:$0xff]
          %v786 = vadd.f32 %v754, %v770
          %v787 = vadd.f32 %v755, %v771
          %v788 = vadd.f32 %v756, %v772
          %v789 = vadd.f32 %v757, %v773
          %v790 = vadd.f32 %v758, %v774
          %v791 = vadd.f32 %v759, %v775
          %v792 = vadd.f32 %v760, %v776
          %v793 = vadd.f32 %v761, %v777
          %v794 = vadd.f32 %v762, %v778
          %v795 = vadd.f32 %v763, %v779
          %v796 = vadd.f32 %v764, %v780
          %v797 = vadd.f32 %v765, %v781
          %v798 = vadd.f32 %v766, %v782
          %v799 = vadd.f32 %v767, %v783
          %v800 = vadd.f32 %v768, %v784
          %v801 = vadd.f32 %v769, %v785
          %v802 = vpack.c.bf16 %v787, %v786
          %v803 = vpack.c.bf16 %v789, %v788
          %v804 = vpack.c.bf16 %v791, %v790
          %v805 = vpack.c.bf16 %v793, %v792
          %v806 = vpack.c.bf16 %v795, %v794
          %v807 = vpack.c.bf16 %v797, %v796
          %v808 = vpack.c.bf16 %v799, %v798
          %v809 = vpack.c.bf16 %v801, %v800
          %v810 = vmul.f32 %v754, %v770
          %v811 = vmul.f32 %v755, %v771
          %v812 = vmul.f32 %v756, %v772
          %v813 = vmul.f32 %v757, %v773
          %v814 = vmul.f32 %v758, %v774
          %v815 = vmul.f32 %v759, %v775
          %v816 = vmul.f32 %v760, %v776
          %v817 = vmul.f32 %v761, %v777
          %v818 = vmul.f32 %v762, %v778
          %v819 = vmul.f32 %v763, %v779
          %v820 = vmul.f32 %v764, %v780
          %v821 = vmul.f32 %v765, %v781
          %v822 = vmul.f32 %v766, %v782
          %v823 = vmul.f32 %v767, %v783
          %v824 = vmul.f32 %v768, %v784
          %v825 = vmul.f32 %v769, %v785
          %v826 = vpack.c.bf16 %v811, %v810
          %v827 = vpack.c.bf16 %v813, %v812
          %v828 = vpack.c.bf16 %v815, %v814
          %v829 = vpack.c.bf16 %v817, %v816
          %v830 = vpack.c.bf16 %v819, %v818
          %v831 = vpack.c.bf16 %v821, %v820
          %v832 = vpack.c.bf16 %v823, %v822
          %v833 = vpack.c.bf16 %v825, %v824
          %v834 = vld [vmem:[%s4] sm:$0xf]
          %v835 = vld [vmem:[%s4 + $0x4] sm:$0xf]
          %v836 = vld [vmem:[%s4 + $0x8] sm:$0xf]
          %v837 = vld [vmem:[%s4 + $0xc] sm:$0xf]
          %v838 = vld [vmem:[%s4 + $0x10] sm:$0xf]
          %v839 = vld [vmem:[%s4 + $0x14] sm:$0xf]
          %v840 = vld [vmem:[%s4 + $0x18] sm:$0xf]
          %v841 = vld [vmem:[%s4 + $0x1c] sm:$0xf]
          %v842 = vld [vmem:[%s4 + $0x20] sm:$0xf]
          %v843 = vld [vmem:[%s4 + $0x24] sm:$0xf]
          %v844 = vld [vmem:[%s4 + $0x28] sm:$0xf]
          %v845 = vld [vmem:[%s4 + $0x2c] sm:$0xf]
          %v846 = vld [vmem:[%s4 + $0x30] sm:$0xf]
          %v847 = vld [vmem:[%s4 + $0x34] sm:$0xf]
          %v848 = vld [vmem:[%s4 + $0x38] sm:$0xf]
          %v849 = vld [vmem:[%s4 + $0x3c] sm:$0xf]
          %v850 = vld [vmem:[%s5] sm:$0x1]
          %v852 = vlaneseq
          %v853 = vshrl.u32 %v852, 7
          %v854 = vsub.s32 0, %v853
          %v855 = vrot.slane %v850, %v854
          %v873 = vunpack.c.l.b16 %v834
          %v874 = vunpack.c.l.b16 %v835
          %v875 = vunpack.c.l.b16 %v836
          %v876 = vunpack.c.l.b16 %v837
          %v877 = vunpack.c.l.b16 %v838
          %v878 = vunpack.c.l.b16 %v839
          %v879 = vunpack.c.l.b16 %v840
          %v880 = vunpack.c.l.b16 %v841
          %v881 = vunpack.c.l.b16 %v842
          %v882 = vunpack.c.l.b16 %v843
          %v883 = vunpack.c.l.b16 %v844
          %v884 = vunpack.c.l.b16 %v845
          %v885 = vunpack.c.l.b16 %v846
          %v886 = vunpack.c.l.b16 %v847
          %v887 = vunpack.c.l.b16 %v848
          %v888 = vunpack.c.l.b16 %v849
          %v889 = vpack.c.b16 %v874, %v873
          %v890 = vpack.c.b16 %v876, %v875
          %v891 = vpack.c.b16 %v878, %v877
          %v892 = vpack.c.b16 %v880, %v879
          %v893 = vpack.c.b16 %v882, %v881
          %v894 = vpack.c.b16 %v884, %v883
          %v895 = vpack.c.b16 %v886, %v885
          %v896 = vpack.c.b16 %v888, %v887
          %905 = vmatprep.subr.bf16.mxu0 0
          %906 = vmatpush1.bf16.msra.mxu0 %v896
          %907 = vmatprep.subr.bf16.mxu0 0
          %908 = vmatpush1.bf16.msra.mxu0 %v895
          %909 = vmatprep.subr.bf16.mxu0 0
          %910 = vmatpush1.bf16.msra.mxu0 %v894
          %911 = vmatprep.subr.bf16.mxu0 0
          %912 = vmatpush1.bf16.msra.mxu0 %v893
          %913 = vmatprep.subr.bf16.mxu0 0
          %914 = vmatpush1.bf16.msra.mxu0 %v892
          %915 = vmatprep.subr.bf16.mxu0 0
          %916 = vmatpush1.bf16.msra.mxu0 %v891
          %917 = vmatprep.subr.bf16.mxu0 0
          %918 = vmatpush1.bf16.msra.mxu0 %v890
          %919 = vmatprep.subr.bf16.mxu0 0
          %920 = vmatpush1.bf16.msra.mxu0 %v889
          %921 = vmatprep.subr.bf16.mxu0 0
          %922 = vmatpush2.bf16.msra.mxu0 0
          %923 = vmatprep.subr.bf16.mxu0 0
          %924 = vmatpush2.bf16.msra.mxu0 0
          %925 = vmatprep.subr.bf16.mxu0 0
          %926 = vmatpush2.bf16.msra.mxu0 0
          %927 = vmatprep.subr.bf16.mxu0 0
          %928 = vmatpush2.bf16.msra.mxu0 0
          %929 = vmatprep.subr.bf16.mxu0 0
          %930 = vmatpush2.bf16.msra.mxu0 0
          %931 = vmatprep.subr.bf16.mxu0 0
          %932 = vmatpush2.bf16.msra.mxu0 0
          %933 = vmatprep.subr.bf16.mxu0 0
          %934 = vmatpush2.bf16.msra.mxu0 0
          %935 = vmatprep.subr.bf16.mxu0 0
          %936 = vmatpush2.bf16.msra.mxu0 0
          %937 = vmatprep.mubr.bf16.mxu0 0
          %938 = vmatmul.mubr.bf16.gmra.mxu0 %v802
          %v939 = vpop.f32.mrf.mxu0
          %v940 = vadd.f32 %v855, %v939
          %v941 = vpop.f32.mrf.mxu0
          %v942 = vpop.f32.mrf.mxu0
          %v943 = vadd.f32 %v855, %v942
          %v944 = vpop.f32.mrf.mxu0
          %945 = vmatprep.mubr.bf16.mxu0 0
          %946 = vmatmul.mubr.bf16.gmra.mxu0 %v803
          %v947 = vpop.f32.mrf.mxu0
          %v948 = vadd.f32 %v855, %v947
          %v949 = vpop.f32.mrf.mxu0
          %v950 = vpop.f32.mrf.mxu0
          %v951 = vadd.f32 %v855, %v950
          %v952 = vpop.f32.mrf.mxu0
          %953 = vmatprep.mubr.bf16.mxu0 0
          %954 = vmatmul.mubr.bf16.gmra.mxu0 %v804
          %v955 = vpop.f32.mrf.mxu0
          %v956 = vadd.f32 %v855, %v955
          %v957 = vpop.f32.mrf.mxu0
          %v958 = vpop.f32.mrf.mxu0
          %v959 = vadd.f32 %v855, %v958
          %v960 = vpop.f32.mrf.mxu0
          %961 = vmatprep.mubr.bf16.mxu0 0
          %962 = vmatmul.mubr.bf16.gmra.mxu0 %v805
          %v963 = vpop.f32.mrf.mxu0
          %v964 = vadd.f32 %v855, %v963
          %v965 = vpop.f32.mrf.mxu0
          %v966 = vpop.f32.mrf.mxu0
          %v967 = vadd.f32 %v855, %v966
          %v968 = vpop.f32.mrf.mxu0
          %969 = vmatprep.mubr.bf16.mxu0 0
          %970 = vmatmul.mubr.bf16.gmra.mxu0 %v806
          %v971 = vpop.f32.mrf.mxu0
          %v972 = vadd.f32 %v855, %v971
          %v973 = vpop.f32.mrf.mxu0
          %v974 = vpop.f32.mrf.mxu0
          %v975 = vadd.f32 %v855, %v974
          %v976 = vpop.f32.mrf.mxu0
          %977 = vmatprep.mubr.bf16.mxu0 0
          %978 = vmatmul.mubr.bf16.gmra.mxu0 %v807
          %v979 = vpop.f32.mrf.mxu0
          %v980 = vadd.f32 %v855, %v979
          %v981 = vpop.f32.mrf.mxu0
          %v982 = vpop.f32.mrf.mxu0
          %v983 = vadd.f32 %v855, %v982
          %v984 = vpop.f32.mrf.mxu0
          %985 = vmatprep.mubr.bf16.mxu0 0
          %986 = vmatmul.mubr.bf16.gmra.mxu0 %v808
          %v987 = vpop.f32.mrf.mxu0
          %v988 = vadd.f32 %v855, %v987
          %v989 = vpop.f32.mrf.mxu0
          %v990 = vpop.f32.mrf.mxu0
          %v991 = vadd.f32 %v855, %v990
          %v992 = vpop.f32.mrf.mxu0
          %993 = vmatprep.mubr.bf16.mxu0 0
          %994 = vmatmul.mubr.bf16.gmra.mxu0 %v809
          %v995 = vpop.f32.mrf.mxu0
          %v996 = vadd.f32 %v855, %v995
          %v997 = vpop.f32.mrf.mxu0
          %v998 = vpop.f32.mrf.mxu0
          %v999 = vadd.f32 %v855, %v998
          %v1000 = vpop.f32.mrf.mxu0
          %1001 = vdwg.mxu0
          %v1002 = vld [vmem:[%s6] sm:$0xf]
          %v1003 = vld [vmem:[%s6 + $0x4] sm:$0xf]
          %v1004 = vld [vmem:[%s6 + $0x8] sm:$0xf]
          %v1005 = vld [vmem:[%s6 + $0xc] sm:$0xf]
          %v1006 = vld [vmem:[%s6 + $0x10] sm:$0xf]
          %v1007 = vld [vmem:[%s6 + $0x14] sm:$0xf]
          %v1008 = vld [vmem:[%s6 + $0x18] sm:$0xf]
          %v1009 = vld [vmem:[%s6 + $0x1c] sm:$0xf]
          %v1010 = vld [vmem:[%s6 + $0x20] sm:$0xf]
          %v1011 = vld [vmem:[%s6 + $0x24] sm:$0xf]
          %v1012 = vld [vmem:[%s6 + $0x28] sm:$0xf]
          %v1013 = vld [vmem:[%s6 + $0x2c] sm:$0xf]
          %v1014 = vld [vmem:[%s6 + $0x30] sm:$0xf]
          %v1015 = vld [vmem:[%s6 + $0x34] sm:$0xf]
          %v1016 = vld [vmem:[%s6 + $0x38] sm:$0xf]
          %v1017 = vld [vmem:[%s6 + $0x3c] sm:$0xf]
          %v1018 = vld [vmem:[%s7] sm:$0x1]
          %v1020 = vlaneseq
          %v1021 = vshrl.u32 %v1020, 7
          %v1022 = vsub.s32 0, %v1021
          %v1023 = vrot.slane %v1018, %v1022
          %v1041 = vunpack.c.l.b16 %v1002
          %v1042 = vunpack.c.l.b16 %v1003
          %v1043 = vunpack.c.l.b16 %v1004
          %v1044 = vunpack.c.l.b16 %v1005
          %v1045 = vunpack.c.l.b16 %v1006
          %v1046 = vunpack.c.l.b16 %v1007
          %v1047 = vunpack.c.l.b16 %v1008
          %v1048 = vunpack.c.l.b16 %v1009
          %v1049 = vunpack.c.l.b16 %v1010
          %v1050 = vunpack.c.l.b16 %v1011
          %v1051 = vunpack.c.l.b16 %v1012
          %v1052 = vunpack.c.l.b16 %v1013
          %v1053 = vunpack.c.l.b16 %v1014
          %v1054 = vunpack.c.l.b16 %v1015
          %v1055 = vunpack.c.l.b16 %v1016
          %v1056 = vunpack.c.l.b16 %v1017
          %v1057 = vpack.c.b16 %v1042, %v1041
          %v1058 = vpack.c.b16 %v1044, %v1043
          %v1059 = vpack.c.b16 %v1046, %v1045
          %v1060 = vpack.c.b16 %v1048, %v1047
          %v1061 = vpack.c.b16 %v1050, %v1049
          %v1062 = vpack.c.b16 %v1052, %v1051
          %v1063 = vpack.c.b16 %v1054, %v1053
          %v1064 = vpack.c.b16 %v1056, %v1055
          %1073 = vmatprep.subr.bf16.mxu0 0
          %1074 = vmatpush1.bf16.msra.mxu0 %v1064
          %1075 = vmatprep.subr.bf16.mxu0 0
          %1076 = vmatpush1.bf16.msra.mxu0 %v1063
          %1077 = vmatprep.subr.bf16.mxu0 0
          %1078 = vmatpush1.bf16.msra.mxu0 %v1062
          %1079 = vmatprep.subr.bf16.mxu0 0
          %1080 = vmatpush1.bf16.msra.mxu0 %v1061
          %1081 = vmatprep.subr.bf16.mxu0 0
          %1082 = vmatpush1.bf16.msra.mxu0 %v1060
          %1083 = vmatprep.subr.bf16.mxu0 0
          %1084 = vmatpush1.bf16.msra.mxu0 %v1059
          %1085 = vmatprep.subr.bf16.mxu0 0
          %1086 = vmatpush1.bf16.msra.mxu0 %v1058
          %1087 = vmatprep.subr.bf16.mxu0 0
          %1088 = vmatpush1.bf16.msra.mxu0 %v1057
          %1089 = vmatprep.subr.bf16.mxu0 0
          %1090 = vmatpush2.bf16.msra.mxu0 0
          %1091 = vmatprep.subr.bf16.mxu0 0
          %1092 = vmatpush2.bf16.msra.mxu0 0
          %1093 = vmatprep.subr.bf16.mxu0 0
          %1094 = vmatpush2.bf16.msra.mxu0 0
          %1095 = vmatprep.subr.bf16.mxu0 0
          %1096 = vmatpush2.bf16.msra.mxu0 0
          %1097 = vmatprep.subr.bf16.mxu0 0
          %1098 = vmatpush2.bf16.msra.mxu0 0
          %1099 = vmatprep.subr.bf16.mxu0 0
          %1100 = vmatpush2.bf16.msra.mxu0 0
          %1101 = vmatprep.subr.bf16.mxu0 0
          %1102 = vmatpush2.bf16.msra.mxu0 0
          %1103 = vmatprep.subr.bf16.mxu0 0
          %1104 = vmatpush2.bf16.msra.mxu0 0
          %1105 = vmatprep.mubr.bf16.mxu0 0
          %1106 = vmatmul.mubr.bf16.gmra.mxu0 %v826
          %v1107 = vpop.f32.mrf.mxu0
          %v1108 = vadd.f32 %v1023, %v1107
          %v1109 = vpop.f32.mrf.mxu0
          %v1110 = vpop.f32.mrf.mxu0
          %v1111 = vadd.f32 %v1023, %v1110
          %v1112 = vpop.f32.mrf.mxu0
          %1113 = vmatprep.mubr.bf16.mxu0 0
          %1114 = vmatmul.mubr.bf16.gmra.mxu0 %v827
          %v1115 = vpop.f32.mrf.mxu0
          %v1116 = vadd.f32 %v1023, %v1115
          %v1117 = vpop.f32.mrf.mxu0
          %v1118 = vpop.f32.mrf.mxu0
          %v1119 = vadd.f32 %v1023, %v1118
          %v1120 = vpop.f32.mrf.mxu0
          %1121 = vmatprep.mubr.bf16.mxu0 0
          %1122 = vmatmul.mubr.bf16.gmra.mxu0 %v828
          %v1123 = vpop.f32.mrf.mxu0
          %v1124 = vadd.f32 %v1023, %v1123
          %v1125 = vpop.f32.mrf.mxu0
          %v1126 = vpop.f32.mrf.mxu0
          %v1127 = vadd.f32 %v1023, %v1126
          %v1128 = vpop.f32.mrf.mxu0
          %1129 = vmatprep.mubr.bf16.mxu0 0
          %1130 = vmatmul.mubr.bf16.gmra.mxu0 %v829
          %v1131 = vpop.f32.mrf.mxu0
          %v1132 = vadd.f32 %v1023, %v1131
          %v1133 = vpop.f32.mrf.mxu0
          %v1134 = vpop.f32.mrf.mxu0
          %v1135 = vadd.f32 %v1023, %v1134
          %v1136 = vpop.f32.mrf.mxu0
          %1137 = vmatprep.mubr.bf16.mxu0 0
          %1138 = vmatmul.mubr.bf16.gmra.mxu0 %v830
          %v1139 = vpop.f32.mrf.mxu0
          %v1140 = vadd.f32 %v1023, %v1139
          %v1141 = vpop.f32.mrf.mxu0
          %v1142 = vpop.f32.mrf.mxu0
          %v1143 = vadd.f32 %v1023, %v1142
          %v1144 = vpop.f32.mrf.mxu0
          %1145 = vmatprep.mubr.bf16.mxu0 0
          %1146 = vmatmul.mubr.bf16.gmra.mxu0 %v831
          %v1147 = vpop.f32.mrf.mxu0
          %v1148 = vadd.f32 %v1023, %v1147
          %v1149 = vpop.f32.mrf.mxu0
          %v1150 = vpop.f32.mrf.mxu0
          %v1151 = vadd.f32 %v1023, %v1150
          %v1152 = vpop.f32.mrf.mxu0
          %1153 = vmatprep.mubr.bf16.mxu0 0
          %1154 = vmatmul.mubr.bf16.gmra.mxu0 %v832
          %v1155 = vpop.f32.mrf.mxu0
          %v1156 = vadd.f32 %v1023, %v1155
          %v1157 = vpop.f32.mrf.mxu0
          %v1158 = vpop.f32.mrf.mxu0
          %v1159 = vadd.f32 %v1023, %v1158
          %v1160 = vpop.f32.mrf.mxu0
          %1161 = vmatprep.mubr.bf16.mxu0 0
          %1162 = vmatmul.mubr.bf16.gmra.mxu0 %v833
          %v1163 = vpop.f32.mrf.mxu0
          %v1164 = vadd.f32 %v1023, %v1163
          %v1165 = vpop.f32.mrf.mxu0
          %v1166 = vpop.f32.mrf.mxu0
          %v1167 = vadd.f32 %v1023, %v1166
          %v1168 = vpop.f32.mrf.mxu0
          %1169 = vdwg.mxu0
          %vm1170 = vcmp.ge.f32.partialorder %v1108, 0.0
          %vm1171 = vcmp.ge.f32.partialorder %v1111, 0.0
          %vm1172 = vcmp.ge.f32.partialorder %v1116, 0.0
          %vm1173 = vcmp.ge.f32.partialorder %v1119, 0.0
          %vm1174 = vcmp.ge.f32.partialorder %v1124, 0.0
          %vm1175 = vcmp.ge.f32.partialorder %v1127, 0.0
          %vm1176 = vcmp.ge.f32.partialorder %v1132, 0.0
          %vm1177 = vcmp.ge.f32.partialorder %v1135, 0.0
          %vm1178 = vcmp.ge.f32.partialorder %v1140, 0.0
          %vm1179 = vcmp.ge.f32.partialorder %v1143, 0.0
          %vm1180 = vcmp.ge.f32.partialorder %v1148, 0.0
          %vm1181 = vcmp.ge.f32.partialorder %v1151, 0.0
          %vm1182 = vcmp.ge.f32.partialorder %v1156, 0.0
          %vm1183 = vcmp.ge.f32.partialorder %v1159, 0.0
          %vm1184 = vcmp.ge.f32.partialorder %v1164, 0.0
          %vm1185 = vcmp.ge.f32.partialorder %v1167, 0.0
          %v1186 = vmul.f32 %v1108, 0.01
          %v1187 = vmul.f32 %v1111, 0.01
          %v1188 = vmul.f32 %v1116, 0.01
          %v1189 = vmul.f32 %v1119, 0.01
          %v1190 = vmul.f32 %v1124, 0.01
          %v1191 = vmul.f32 %v1127, 0.01
          %v1192 = vmul.f32 %v1132, 0.01
          %v1193 = vmul.f32 %v1135, 0.01
          %v1194 = vmul.f32 %v1140, 0.01
          %v1195 = vmul.f32 %v1143, 0.01
          %v1196 = vmul.f32 %v1148, 0.01
          %v1197 = vmul.f32 %v1151, 0.01
          %v1198 = vmul.f32 %v1156, 0.01
          %v1199 = vmul.f32 %v1159, 0.01
          %v1200 = vmul.f32 %v1164, 0.01
          %v1201 = vmul.f32 %v1167, 0.01
          %v1202 = vsel %vm1170, %v1108, %v1186
          %v1203 = vsel %vm1171, %v1111, %v1187
          %v1204 = vsel %vm1172, %v1116, %v1188
          %v1205 = vsel %vm1173, %v1119, %v1189
          %v1206 = vsel %vm1174, %v1124, %v1190
          %v1207 = vsel %vm1175, %v1127, %v1191
          %v1208 = vsel %vm1176, %v1132, %v1192
          %v1209 = vsel %vm1177, %v1135, %v1193
          %v1210 = vsel %vm1178, %v1140, %v1194
          %v1211 = vsel %vm1179, %v1143, %v1195
          %v1212 = vsel %vm1180, %v1148, %v1196
          %v1213 = vsel %vm1181, %v1151, %v1197
          %v1214 = vsel %vm1182, %v1156, %v1198
          %v1215 = vsel %vm1183, %v1159, %v1199
          %v1216 = vsel %vm1184, %v1164, %v1200
          %v1217 = vsel %vm1185, %v1167, %v1201
          %vm1218 = vcmp.ge.f32.partialorder %v940, 0.0
          %vm1219 = vcmp.ge.f32.partialorder %v943, 0.0
          %vm1220 = vcmp.ge.f32.partialorder %v948, 0.0
          %vm1221 = vcmp.ge.f32.partialorder %v951, 0.0
          %vm1222 = vcmp.ge.f32.partialorder %v956, 0.0
          %vm1223 = vcmp.ge.f32.partialorder %v959, 0.0
          %vm1224 = vcmp.ge.f32.partialorder %v964, 0.0
          %vm1225 = vcmp.ge.f32.partialorder %v967, 0.0
          %vm1226 = vcmp.ge.f32.partialorder %v972, 0.0
          %vm1227 = vcmp.ge.f32.partialorder %v975, 0.0
          %vm1228 = vcmp.ge.f32.partialorder %v980, 0.0
          %vm1229 = vcmp.ge.f32.partialorder %v983, 0.0
          %vm1230 = vcmp.ge.f32.partialorder %v988, 0.0
          %vm1231 = vcmp.ge.f32.partialorder %v991, 0.0
          %vm1232 = vcmp.ge.f32.partialorder %v996, 0.0
          %vm1233 = vcmp.ge.f32.partialorder %v999, 0.0
          %v1234 = vmul.f32 %v940, 0.01
          %v1235 = vmul.f32 %v943, 0.01
          %v1236 = vmul.f32 %v948, 0.01
          %v1237 = vmul.f32 %v951, 0.01
          %v1238 = vmul.f32 %v956, 0.01
          %v1239 = vmul.f32 %v959, 0.01
          %v1240 = vmul.f32 %v964, 0.01
          %v1241 = vmul.f32 %v967, 0.01
          %v1242 = vmul.f32 %v972, 0.01
          %v1243 = vmul.f32 %v975, 0.01
          %v1244 = vmul.f32 %v980, 0.01
          %v1245 = vmul.f32 %v983, 0.01
          %v1246 = vmul.f32 %v988, 0.01
          %v1247 = vmul.f32 %v991, 0.01
          %v1248 = vmul.f32 %v996, 0.01
          %v1249 = vmul.f32 %v999, 0.01
          %v1250 = vsel %vm1218, %v940, %v1234
          %v1251 = vsel %vm1219, %v943, %v1235
          %v1252 = vsel %vm1220, %v948, %v1236
          %v1253 = vsel %vm1221, %v951, %v1237
          %v1254 = vsel %vm1222, %v956, %v1238
          %v1255 = vsel %vm1223, %v959, %v1239
          %v1256 = vsel %vm1224, %v964, %v1240
          %v1257 = vsel %vm1225, %v967, %v1241
          %v1258 = vsel %vm1226, %v972, %v1242
          %v1259 = vsel %vm1227, %v975, %v1243
          %v1260 = vsel %vm1228, %v980, %v1244
          %v1261 = vsel %vm1229, %v983, %v1245
          %v1262 = vsel %vm1230, %v988, %v1246
          %v1263 = vsel %vm1231, %v991, %v1247
          %v1264 = vsel %vm1232, %v996, %v1248
          %v1265 = vsel %vm1233, %v999, %v1249
          %v1266 = vadd.f32 %v1202, %v1250
          %v1267 = vadd.f32 %v1203, %v1251
          %v1268 = vadd.f32 %v1204, %v1252
          %v1269 = vadd.f32 %v1205, %v1253
          %v1270 = vadd.f32 %v1206, %v1254
          %v1271 = vadd.f32 %v1207, %v1255
          %v1272 = vadd.f32 %v1208, %v1256
          %v1273 = vadd.f32 %v1209, %v1257
          %v1274 = vadd.f32 %v1210, %v1258
          %v1275 = vadd.f32 %v1211, %v1259
          %v1276 = vadd.f32 %v1212, %v1260
          %v1277 = vadd.f32 %v1213, %v1261
          %v1278 = vadd.f32 %v1214, %v1262
          %v1279 = vadd.f32 %v1215, %v1263
          %v1280 = vadd.f32 %v1216, %v1264
          %v1281 = vadd.f32 %v1217, %v1265
          %1282 = vst [vmem:[%s416] sm:$0xff] %v1266
          %1283 = vst [vmem:[%s416 + $0x8] sm:$0xff] %v1267
          %1284 = vst [vmem:[%s416 + $0x10] sm:$0xff] %v1268
          %1285 = vst [vmem:[%s416 + $0x18] sm:$0xff] %v1269
          %1286 = vst [vmem:[%s416 + $0x20] sm:$0xff] %v1270
          %1287 = vst [vmem:[%s416 + $0x28] sm:$0xff] %v1271
          %1288 = vst [vmem:[%s416 + $0x30] sm:$0xff] %v1272
          %1289 = vst [vmem:[%s416 + $0x38] sm:$0xff] %v1273
          %1290 = vst [vmem:[%s416 + $0x40] sm:$0xff] %v1274
          %1291 = vst [vmem:[%s416 + $0x48] sm:$0xff] %v1275
          %1292 = vst [vmem:[%s416 + $0x50] sm:$0xff] %v1276
          %1293 = vst [vmem:[%s416 + $0x58] sm:$0xff] %v1277
          %1294 = vst [vmem:[%s416 + $0x60] sm:$0xff] %v1278
          %1295 = vst [vmem:[%s416 + $0x68] sm:$0xff] %v1279
          %1296 = vst [vmem:[%s416 + $0x70] sm:$0xff] %v1280
          %1297 = vst [vmem:[%s416 + $0x78] sm:$0xff] %v1281
        $region97: #{kgat_bi_aggregator.1} parent=80 // pred_fallthru
          _
        %s1298 = smul.u32 16, %s33
        %p1299 = scmp.lt.s32.totalorder %s1298, 31
        %s1300 = scalar_select %p1299, %s1298, 31
        %s1301 = smul.addr %s1300, 8
        %s1302 = scalar_lea.vmem %s8, %s1301
        // Predicated region
        $region98: #{kgat_bi_aggregator.1} parent=80 // pred_check
          %p1303 = pneg %p208
        $region99: #{kgat_bi_aggregator.1} parent=80 // pred_check_branch
          %1305 = sbr.rel (%p1303) target = $region101
        $region100: #{kgat_bi_aggregator.1} parent=80 // pred_region
          %s1306 = smul.u32 16, %s33
        $region101: #{kgat_bi_aggregator.1} parent=80 // pred_fallthru
          _
      $region81: #{kgat_bi_aggregator.1} parent=5 // pred_fallthru
        _
      %p1307 = scmp.le.s32.totalorder 2, %s24
      // Predicated region
      $region102: #{kgat_bi_aggregator.1} parent=5 // pred_check
        %p1308 = pneg %p1307
      $region103: #{kgat_bi_aggregator.1} parent=5 // pred_check_branch
        %1310 = sbr.rel (%p1308) target = $region105
      $region104: #{kgat_bi_aggregator.1} parent=5 // pred_region
        %s1311 = ssub.s32 %s24, 2
        // Predicated region
        $region106: #{kgat_bi_aggregator.1} parent=104 // pred_check
          %p1312 = pneg %p214
        $region107: #{kgat_bi_aggregator.1} parent=104 // pred_check_branch
          %1314 = sbr.rel (%p1312) target = $region109
        $region108: #{kgat_bi_aggregator.1} parent=104 // pred_region
          %s1315 = smul.u32 16, %s35
          %p1316 = scmp.lt.s32.totalorder %s1315, 31
          %s1317 = scalar_select %p1316, %s1315, 31
          %s1318 = smul.addr %s1317, 8
          %s1319 = scalar_lea.vmem %s8, %s1318
        $region109: #{kgat_bi_aggregator.1} parent=104 // pred_fallthru
          _
      $region105: #{kgat_bi_aggregator.1} parent=5 // pred_fallthru
        _
    $region6: #{kgat_bi_aggregator.1} parent=1 // loop_footer
      %s28 = sadd.s32 1, %s24
    $region7: #{kgat_bi_aggregator.1} parent=1 // loop_footer_branch
      %23 = sbr.rel target = $region3
    $region8: #{kgat_bi_aggregator.1} parent=1 // loop_exit
      _

</llo_original>
